<compile_context>
chip_gen: v7x
topology: tpu7x:2x2x1
jax: 0.10.0
libtpu: 0.0.40
codegen_flags: <defaults>
</compile_context>

<pallas_src>
import functools

import jax
import jax.numpy as jnp
from jax.experimental import pallas as pl
from jax.experimental.pallas import tpu as pltpu


def _round_up(x, m):
    return (x + m - 1) // m * m


def _default_num_batch_tiles():
    """2 parallel batch tiles on v7x (2 TensorCores/chip), 1 otherwise."""
    try:
        kind = jax.devices()[0].device_kind.lower()
    except Exception:  # pragma: no cover - be robust to odd backends
        kind = ""
    return 2 if "v7" in kind else 1


def _fused_mlp_kernel(num_layers, x_ref, *refs):
    """refs = (w_0, b_0, w_1, b_1, ..., w_{L-1}, b_{L-1}, o_ref).

    All layers are unrolled at trace time; intermediate activations stay as
    bf16 values (vregs), never stored to VMEM/HBM between layers.
    """
    o_ref = refs[-1]
    x = x_ref[...]                                    # bf16 [TB, D0p]
    for l in range(num_layers):
        w = refs[2 * l][...]                          # bf16 [Din_p, Dout_p]
        b = refs[2 * l + 1][...]                      # f32  [1,    Dout_p]
        y = jnp.dot(x, w, preferred_element_type=jnp.float32)  # MXU, f32 acc
        act = jnp.maximum(y + b, 0.0)                 # bias + ReLU in f32 (VPU)
        # Keep running activation bf16; last layer stays f32 for the store.
        x = act.astype(jnp.bfloat16) if l < num_layers - 1 else act
    o_ref[...] = x.astype(o_ref.dtype)


def prepare_autoencoder(params, *, num_batch_tiles=None, out_dtype=jnp.float32):
    """One-time parameter prep; returns a jitted forward(x) -> [B, input_size].

    params: list of (w [Din, Dout] f32, b [Dout] f32)  (weights stored [in,out],
    i.e. transposed vs. PyTorch's [out,in], so the kernel computes y = x@W + b).
    """
    if num_batch_tiles is None:
        num_batch_tiles = _default_num_batch_tiles()

    num_layers = len(params)
    dims = [params[0][0].shape[0]] + [w.shape[1] for (w, _) in params]
    pdims = [_round_up(d, 128) for d in dims]

    # Zero-pad weights (cast to bf16) and biases (kept f32) ONCE.  Zero padding
    # is exact: padded activation columns are relu(0 + 0) = 0 and padded weight
    # rows are 0, so they contribute nothing to real outputs.
    flat_wb = []
    for l, (w, b) in enumerate(params):
        wp = jnp.zeros((pdims[l], pdims[l + 1]), jnp.bfloat16)
        wp = wp.at[: w.shape[0], : w.shape[1]].set(w.astype(jnp.bfloat16))
        bp = jnp.zeros((1, pdims[l + 1]), jnp.float32)
        bp = bp.at[0, : b.shape[0]].set(b.astype(jnp.float32))
        flat_wb += [wp, bp]
    flat_wb = [jax.block_until_ready(a) for a in flat_wb]

    Dout_p = pdims[-1]

    @jax.jit
    def forward(x):
        B, Din = x.shape
        assert Din == dims[0], (Din, dims[0])

        # Per-core batch tile (8-sublane aligned); exactly num_batch_tiles grid
        # steps unless the batch is too small to fill them.
        TB = _round_up(-(-B // num_batch_tiles), 8)
        Bp = TB * num_batch_tiles
        while Bp - TB >= _round_up(B, 8):   # drop empty trailing tiles
            Bp -= TB
        grid_steps = Bp // TB

        xb = x.astype(jnp.bfloat16)          # feed kernel bf16 (half the DMA)
        if (Bp, pdims[0]) != (B, Din):       # pad only when actually needed
            xb = jnp.zeros((Bp, pdims[0]), jnp.bfloat16).at[:B, :Din].set(xb)

        in_specs = [pl.BlockSpec((TB, pdims[0]), lambda i: (i, 0))]
        for l in range(num_layers):
            # Grid-invariant full-array blocks -> weights/biases stay resident.
            in_specs.append(pl.BlockSpec(flat_wb[2 * l].shape, lambda i: (0, 0)))
            in_specs.append(pl.BlockSpec(flat_wb[2 * l + 1].shape,
                                         lambda i: (0, 0)))

        flops = sum(2 * Bp * pdims[l] * pdims[l + 1] for l in range(num_layers))
        bytes_accessed = (
            xb.size * xb.dtype.itemsize
            + sum(a.size * a.dtype.itemsize for a in flat_wb)
            + Bp * Dout_p * jnp.dtype(out_dtype).itemsize
        )

        out = pl.pallas_call(
            functools.partial(_fused_mlp_kernel, num_layers),
            out_shape=jax.ShapeDtypeStruct((Bp, Dout_p), out_dtype),
            grid=(grid_steps,),
            in_specs=in_specs,
            out_specs=pl.BlockSpec((TB, Dout_p), lambda i: (i, 0)),
            compiler_params=pltpu.CompilerParams(
                dimension_semantics=("parallel",)),
            cost_estimate=pl.CostEstimate(
                flops=flops, transcendentals=0, bytes_accessed=bytes_accessed),
        )(xb, *flat_wb)

        if (Bp, Dout_p) != (B, dims[-1]):
            out = out[:B, : dims[-1]]
        return out

    return forward


def make_autoencoder_params(key, input_size, fc_list):
    """Deterministic params; layer sizes follow erfh5_Autoencoder.__get_fc."""
    sizes = []
    s = input_size
    for num in fc_list:                       # encoder
        sizes.append((s, num))
        s = num
    for num in reversed(fc_list[:-1]):        # decoder (mirror, minus last)
        sizes.append((s, num))
        s = num
    sizes.append((s, input_size))             # final reconstruction layer

    params = []
    for (din, dout) in sizes:
        key, kw, kb = jax.random.split(key, 3)
        bound = 1.0 / jnp.sqrt(din)           # matches nn.Linear default init
        w = jax.random.uniform(kw, (din, dout), jnp.float32, -bound, bound)
        b = jax.random.uniform(kb, (dout,), jnp.float32, -bound, bound)
        params.append((w, b))
    return params


def reference_forward(x, params):
    """Pure-JAX reference on the same precision path (bf16 activations/weights,
    f32 accumulation, f32 final layer)."""
    y = x.astype(jnp.bfloat16)
    n = len(params)
    for i, (w, b) in enumerate(params):
        acc = jnp.dot(y, w.astype(jnp.bfloat16),
                      preferred_element_type=jnp.float32) + b.astype(jnp.float32)
        act = jnp.maximum(acc, 0.0)
        y = act.astype(jnp.bfloat16) if i < n - 1 else act
    return y.astype(jnp.float32)


if __name__ == "__main__":
    key = jax.random.PRNGKey(0)
    batch = 256            # two 128-row tiles on v7x, one 256-row tile otherwise
    input_size = 256
    fc_list = [128, 64, 32]

    kx, kp = jax.random.split(key)
    x = jax.random.normal(kx, (batch, input_size), jnp.float32)
    params = make_autoencoder_params(kp, input_size, fc_list)

    forward = prepare_autoencoder(params)    # one-time pad/cast, jitted closure
    out = jax.block_until_ready(forward(x))

    ref = reference_forward(x, params)
    assert out.shape == (batch, input_size), out.shape
    assert jnp.allclose(out, ref, atol=2e-2, rtol=2e-2), "mismatch vs reference"

    print("KERNEL_OK")
</pallas_src>

<mosaic_0001>
module attributes {stable_mosaic.version = 11 : i64} {
  func.func @_fused_mlp_kernel(%arg0: i32, %arg1: memref<256x256xbf16, #tpu.memory_space<vmem>>, %arg2: memref<256x128xbf16, #tpu.memory_space<vmem>>, %arg3: memref<1x128xf32, #tpu.memory_space<vmem>>, %arg4: memref<128x128xbf16, #tpu.memory_space<vmem>>, %arg5: memref<1x128xf32, #tpu.memory_space<vmem>>, %arg6: memref<128x128xbf16, #tpu.memory_space<vmem>>, %arg7: memref<1x128xf32, #tpu.memory_space<vmem>>, %arg8: memref<128x128xbf16, #tpu.memory_space<vmem>>, %arg9: memref<1x128xf32, #tpu.memory_space<vmem>>, %arg10: memref<128x128xbf16, #tpu.memory_space<vmem>>, %arg11: memref<1x128xf32, #tpu.memory_space<vmem>>, %arg12: memref<128x256xbf16, #tpu.memory_space<vmem>>, %arg13: memref<1x256xf32, #tpu.memory_space<vmem>>, %arg14: memref<256x256xf32, #tpu.memory_space<vmem>>) attributes {dimension_semantics = [#tpu.dimension_semantics<parallel>], iteration_bounds = array<i64: 1>, scalar_prefetch = 0 : i64, scratch_operands = 0 : i64, tpu.core_type = #tpu.core_type<tc>, window_params = [{transform_indices = @transform_0, window_bounds = array<i64: 256, 256>}, {pipeline_mode = #tpu.pipeline_mode<synchronous>, transform_indices = @transform_1, window_bounds = array<i64: 256, 128>}, {pipeline_mode = #tpu.pipeline_mode<synchronous>, transform_indices = @transform_2, window_bounds = array<i64: 1, 128>}, {pipeline_mode = #tpu.pipeline_mode<synchronous>, transform_indices = @transform_3, window_bounds = array<i64: 128, 128>}, {pipeline_mode = #tpu.pipeline_mode<synchronous>, transform_indices = @transform_4, window_bounds = array<i64: 1, 128>}, {pipeline_mode = #tpu.pipeline_mode<synchronous>, transform_indices = @transform_5, window_bounds = array<i64: 128, 128>}, {pipeline_mode = #tpu.pipeline_mode<synchronous>, transform_indices = @transform_6, window_bounds = array<i64: 1, 128>}, {pipeline_mode = #tpu.pipeline_mode<synchronous>, transform_indices = @transform_7, window_bounds = array<i64: 128, 128>}, {pipeline_mode = #tpu.pipeline_mode<synchronous>, transform_indices = @transform_8, window_bounds = array<i64: 1, 128>}, {pipeline_mode = #tpu.pipeline_mode<synchronous>, transform_indices = @transform_9, window_bounds = array<i64: 128, 128>}, {pipeline_mode = #tpu.pipeline_mode<synchronous>, transform_indices = @transform_10, window_bounds = array<i64: 1, 128>}, {pipeline_mode = #tpu.pipeline_mode<synchronous>, transform_indices = @transform_11, window_bounds = array<i64: 128, 256>}, {pipeline_mode = #tpu.pipeline_mode<synchronous>, transform_indices = @transform_12, window_bounds = array<i64: 1, 256>}, {transform_indices = @transform_13, window_bounds = array<i64: 256, 256>}]} {
    %c0 = arith.constant 0 : index
    %c0_0 = arith.constant 0 : index
    %0 = vector.load %arg1[%c0, %c0_0] : memref<256x256xbf16, #tpu.memory_space<vmem>>, vector<256x256xbf16>
    %c0_1 = arith.constant 0 : index
    %c0_2 = arith.constant 0 : index
    %1 = vector.load %arg2[%c0_1, %c0_2] : memref<256x128xbf16, #tpu.memory_space<vmem>>, vector<256x128xbf16>
    %c0_3 = arith.constant 0 : index
    %c0_4 = arith.constant 0 : index
    %2 = vector.load %arg3[%c0_3, %c0_4] : memref<1x128xf32, #tpu.memory_space<vmem>>, vector<1x128xf32>
    %cst = arith.constant dense<0.000000e+00> : vector<256x128xf32>
    %3 = tpu.matmul %0, %1, %cst {dimension_numbers = #tpu.dot_dimension_numbers<[1], [0], [0], [1], [0, 0, 1, 1], [], []>} : vector<256x256xbf16>, vector<256x128xbf16>, vector<256x128xf32> -> vector<256x128xf32>
    %4 = vector.broadcast %2 : vector<1x128xf32> to vector<256x128xf32>
    %5 = arith.addf %3, %4 : vector<256x128xf32>
    %cst_5 = arith.constant 0.000000e+00 : f32
    %6 = vector.broadcast %cst_5 : f32 to vector<256x128xf32>
    %7 = arith.maximumf %5, %6 : vector<256x128xf32>
    %8 = arith.truncf %7 : vector<256x128xf32> to vector<256x128xbf16>
    %c0_6 = arith.constant 0 : index
    %c0_7 = arith.constant 0 : index
    %9 = vector.load %arg4[%c0_6, %c0_7] : memref<128x128xbf16, #tpu.memory_space<vmem>>, vector<128x128xbf16>
    %c0_8 = arith.constant 0 : index
    %c0_9 = arith.constant 0 : index
    %10 = vector.load %arg5[%c0_8, %c0_9] : memref<1x128xf32, #tpu.memory_space<vmem>>, vector<1x128xf32>
    %cst_10 = arith.constant dense<0.000000e+00> : vector<256x128xf32>
    %11 = tpu.matmul %8, %9, %cst_10 {dimension_numbers = #tpu.dot_dimension_numbers<[1], [0], [0], [1], [0, 0, 1, 1], [], []>} : vector<256x128xbf16>, vector<128x128xbf16>, vector<256x128xf32> -> vector<256x128xf32>
    %12 = vector.broadcast %10 : vector<1x128xf32> to vector<256x128xf32>
    %13 = arith.addf %11, %12 : vector<256x128xf32>
    %cst_11 = arith.constant 0.000000e+00 : f32
    %14 = vector.broadcast %cst_11 : f32 to vector<256x128xf32>
    %15 = arith.maximumf %13, %14 : vector<256x128xf32>
    %16 = arith.truncf %15 : vector<256x128xf32> to vector<256x128xbf16>
    %c0_12 = arith.constant 0 : index
    %c0_13 = arith.constant 0 : index
    %17 = vector.load %arg6[%c0_12, %c0_13] : memref<128x128xbf16, #tpu.memory_space<vmem>>, vector<128x128xbf16>
    %c0_14 = arith.constant 0 : index
    %c0_15 = arith.constant 0 : index
    %18 = vector.load %arg7[%c0_14, %c0_15] : memref<1x128xf32, #tpu.memory_space<vmem>>, vector<1x128xf32>
    %cst_16 = arith.constant dense<0.000000e+00> : vector<256x128xf32>
    %19 = tpu.matmul %16, %17, %cst_16 {dimension_numbers = #tpu.dot_dimension_numbers<[1], [0], [0], [1], [0, 0, 1, 1], [], []>} : vector<256x128xbf16>, vector<128x128xbf16>, vector<256x128xf32> -> vector<256x128xf32>
    %20 = vector.broadcast %18 : vector<1x128xf32> to vector<256x128xf32>
    %21 = arith.addf %19, %20 : vector<256x128xf32>
    %cst_17 = arith.constant 0.000000e+00 : f32
    %22 = vector.broadcast %cst_17 : f32 to vector<256x128xf32>
    %23 = arith.maximumf %21, %22 : vector<256x128xf32>
    %24 = arith.truncf %23 : vector<256x128xf32> to vector<256x128xbf16>
    %c0_18 = arith.constant 0 : index
    %c0_19 = arith.constant 0 : index
    %25 = vector.load %arg8[%c0_18, %c0_19] : memref<128x128xbf16, #tpu.memory_space<vmem>>, vector<128x128xbf16>
    %c0_20 = arith.constant 0 : index
    %c0_21 = arith.constant 0 : index
    %26 = vector.load %arg9[%c0_20, %c0_21] : memref<1x128xf32, #tpu.memory_space<vmem>>, vector<1x128xf32>
    %cst_22 = arith.constant dense<0.000000e+00> : vector<256x128xf32>
    %27 = tpu.matmul %24, %25, %cst_22 {dimension_numbers = #tpu.dot_dimension_numbers<[1], [0], [0], [1], [0, 0, 1, 1], [], []>} : vector<256x128xbf16>, vector<128x128xbf16>, vector<256x128xf32> -> vector<256x128xf32>
    %28 = vector.broadcast %26 : vector<1x128xf32> to vector<256x128xf32>
    %29 = arith.addf %27, %28 : vector<256x128xf32>
    %cst_23 = arith.constant 0.000000e+00 : f32
    %30 = vector.broadcast %cst_23 : f32 to vector<256x128xf32>
    %31 = arith.maximumf %29, %30 : vector<256x128xf32>
    %32 = arith.truncf %31 : vector<256x128xf32> to vector<256x128xbf16>
    %c0_24 = arith.constant 0 : index
    %c0_25 = arith.constant 0 : index
    %33 = vector.load %arg10[%c0_24, %c0_25] : memref<128x128xbf16, #tpu.memory_space<vmem>>, vector<128x128xbf16>
    %c0_26 = arith.constant 0 : index
    %c0_27 = arith.constant 0 : index
    %34 = vector.load %arg11[%c0_26, %c0_27] : memref<1x128xf32, #tpu.memory_space<vmem>>, vector<1x128xf32>
    %cst_28 = arith.constant dense<0.000000e+00> : vector<256x128xf32>
    %35 = tpu.matmul %32, %33, %cst_28 {dimension_numbers = #tpu.dot_dimension_numbers<[1], [0], [0], [1], [0, 0, 1, 1], [], []>} : vector<256x128xbf16>, vector<128x128xbf16>, vector<256x128xf32> -> vector<256x128xf32>
    %36 = vector.broadcast %34 : vector<1x128xf32> to vector<256x128xf32>
    %37 = arith.addf %35, %36 : vector<256x128xf32>
    %cst_29 = arith.constant 0.000000e+00 : f32
    %38 = vector.broadcast %cst_29 : f32 to vector<256x128xf32>
    %39 = arith.maximumf %37, %38 : vector<256x128xf32>
    %40 = arith.truncf %39 : vector<256x128xf32> to vector<256x128xbf16>
    %c0_30 = arith.constant 0 : index
    %c0_31 = arith.constant 0 : index
    %41 = vector.load %arg12[%c0_30, %c0_31] : memref<128x256xbf16, #tpu.memory_space<vmem>>, vector<128x256xbf16>
    %c0_32 = arith.constant 0 : index
    %c0_33 = arith.constant 0 : index
    %42 = vector.load %arg13[%c0_32, %c0_33] : memref<1x256xf32, #tpu.memory_space<vmem>>, vector<1x256xf32>
    %cst_34 = arith.constant dense<0.000000e+00> : vector<256x256xf32>
    %43 = tpu.matmul %40, %41, %cst_34 {dimension_numbers = #tpu.dot_dimension_numbers<[1], [0], [0], [1], [0, 0, 1, 1], [], []>} : vector<256x128xbf16>, vector<128x256xbf16>, vector<256x256xf32> -> vector<256x256xf32>
    %44 = vector.broadcast %42 : vector<1x256xf32> to vector<256x256xf32>
    %45 = arith.addf %43, %44 : vector<256x256xf32>
    %cst_35 = arith.constant 0.000000e+00 : f32
    %46 = vector.broadcast %cst_35 : f32 to vector<256x256xf32>
    %47 = arith.maximumf %45, %46 : vector<256x256xf32>
    %c0_36 = arith.constant 0 : index
    %c0_37 = arith.constant 0 : index
    %48 = vector.load %arg14[%c0_36, %c0_37] : memref<256x256xf32, #tpu.memory_space<vmem>>, vector<256x256xf32>
    tpu.vector_store %arg14[%c0_36, %c0_37], %47 {strides = array<i32>} : memref<256x256xf32, #tpu.memory_space<vmem>>, vector<256x256xf32>,
    return
  }
  func.func @transform_0(%arg0: i32) -> (i32, i32) {
    %c0_i32 = arith.constant 0 : i32
    %c0_i32_0 = arith.constant 0 : i32
    return %arg0, %c0_i32 : i32, i32
  }
  func.func @transform_1(%arg0: i32) -> (i32, i32) {
    %c0_i32 = arith.constant 0 : i32
    %c0_i32_0 = arith.constant 0 : i32
    %c0_i32_1 = arith.constant 0 : i32
    return %c0_i32, %c0_i32_0 : i32, i32
  }
  func.func @transform_2(%arg0: i32) -> (i32, i32) {
    %c0_i32 = arith.constant 0 : i32
    %c0_i32_0 = arith.constant 0 : i32
    %c0_i32_1 = arith.constant 0 : i32
    return %c0_i32, %c0_i32_0 : i32, i32
  }
  func.func @transform_3(%arg0: i32) -> (i32, i32) {
    %c0_i32 = arith.constant 0 : i32
    %c0_i32_0 = arith.constant 0 : i32
    %c0_i32_1 = arith.constant 0 : i32
    return %c0_i32, %c0_i32_0 : i32, i32
  }
  func.func @transform_4(%arg0: i32) -> (i32, i32) {
    %c0_i32 = arith.constant 0 : i32
    %c0_i32_0 = arith.constant 0 : i32
    %c0_i32_1 = arith.constant 0 : i32
    return %c0_i32, %c0_i32_0 : i32, i32
  }
  func.func @transform_5(%arg0: i32) -> (i32, i32) {
    %c0_i32 = arith.constant 0 : i32
    %c0_i32_0 = arith.constant 0 : i32
    %c0_i32_1 = arith.constant 0 : i32
    return %c0_i32, %c0_i32_0 : i32, i32
  }
  func.func @transform_6(%arg0: i32) -> (i32, i32) {
    %c0_i32 = arith.constant 0 : i32
    %c0_i32_0 = arith.constant 0 : i32
    %c0_i32_1 = arith.constant 0 : i32
    return %c0_i32, %c0_i32_0 : i32, i32
  }
  func.func @transform_7(%arg0: i32) -> (i32, i32) {
    %c0_i32 = arith.constant 0 : i32
    %c0_i32_0 = arith.constant 0 : i32
    %c0_i32_1 = arith.constant 0 : i32
    return %c0_i32, %c0_i32_0 : i32, i32
  }
  func.func @transform_8(%arg0: i32) -> (i32, i32) {
    %c0_i32 = arith.constant 0 : i32
    %c0_i32_0 = arith.constant 0 : i32
    %c0_i32_1 = arith.constant 0 : i32
    return %c0_i32, %c0_i32_0 : i32, i32
  }
  func.func @transform_9(%arg0: i32) -> (i32, i32) {
    %c0_i32 = arith.constant 0 : i32
    %c0_i32_0 = arith.constant 0 : i32
    %c0_i32_1 = arith.constant 0 : i32
    return %c0_i32, %c0_i32_0 : i32, i32
  }
  func.func @transform_10(%arg0: i32) -> (i32, i32) {
    %c0_i32 = arith.constant 0 : i32
    %c0_i32_0 = arith.constant 0 : i32
    %c0_i32_1 = arith.constant 0 : i32
    return %c0_i32, %c0_i32_0 : i32, i32
  }
  func.func @transform_11(%arg0: i32) -> (i32, i32) {
    %c0_i32 = arith.constant 0 : i32
    %c0_i32_0 = arith.constant 0 : i32
    %c0_i32_1 = arith.constant 0 : i32
    return %c0_i32, %c0_i32_0 : i32, i32
  }
  func.func @transform_12(%arg0: i32) -> (i32, i32) {
    %c0_i32 = arith.constant 0 : i32
    %c0_i32_0 = arith.constant 0 : i32
    %c0_i32_1 = arith.constant 0 : i32
    return %c0_i32, %c0_i32_0 : i32, i32
  }
  func.func @transform_13(%arg0: i32) -> (i32, i32) {
    %c0_i32 = arith.constant 0 : i32
    %c0_i32_0 = arith.constant 0 : i32
    return %arg0, %c0_i32 : i32, i32
  }
}

</mosaic_0001>

<llo_original>
// kernel: forward.1
$region0: #{forward.1}
  #allocation0 [shape = 'u32[]', space=smem, size = 0x4, offset = 0x4, fixed_abs, tag = 'smem constant byte address 0x4 - core index']
  #allocation1 [shape = 'u32[144,128]{1,0:T(1,128)}', space=vmem, size = 0x12000, scoped, tag = 'internal scratch']
  %s0 = inlined_call_operand.vmem [shape: bf16[256,256], index: 0, kind: input, shape index: {}]
  %s1 = inlined_call_operand.vmem [shape: bf16[256,128], index: 1, kind: input, shape index: {}]
  %s2 = inlined_call_operand.vmem [shape: f32[1,128], index: 2, kind: input, shape index: {}]
  %s3 = inlined_call_operand.vmem [shape: bf16[128,128], index: 3, kind: input, shape index: {}]
  %s4 = inlined_call_operand.vmem [shape: f32[1,128], index: 4, kind: input, shape index: {}]
  %s5 = inlined_call_operand.vmem [shape: bf16[128,128], index: 5, kind: input, shape index: {}]
  %s6 = inlined_call_operand.vmem [shape: f32[1,128], index: 6, kind: input, shape index: {}]
  %s7 = inlined_call_operand.vmem [shape: bf16[128,128], index: 7, kind: input, shape index: {}]
  %s8 = inlined_call_operand.vmem [shape: f32[1,128], index: 8, kind: input, shape index: {}]
  %s9 = inlined_call_operand.vmem [shape: bf16[128,128], index: 9, kind: input, shape index: {}]
  %s10 = inlined_call_operand.vmem [shape: f32[1,128], index: 10, kind: input, shape index: {}]
  %s11 = inlined_call_operand.vmem [shape: bf16[128,256], index: 11, kind: input, shape index: {}]
  %s12 = inlined_call_operand.vmem [shape: f32[1,256], index: 12, kind: input, shape index: {}]
  %s13 = inlined_call_operand.hbm [shape: f32[256,256], index: 13, kind: output, shape index: {}]
  %s14 = sld [smem:[#allocation0]]
  $region62: #{forward.1} parent=0
    _
  %s16 = ssub.s32 1, %s14
  %s17 = scalar_select 0, %s16, %s14
  $region1: #{forward.1} parent=0
    #allocation2 [shape = 'u8[262144]{0}', space=vmem, size = 0x40000, scoped, tag = 'output window, operand 0, single buffered']
    #allocation3 [shape = 's32[1]{0}', space=sflag, size = 0x4, scoped, tag = 'scoped memory for forward.1']
    %18 = vsyncpa [#allocation3], 0
    // Predicated region
    $region2: #{forward.1} parent=1 // pred_check
      _
    $region3: #{forward.1} parent=1 // pred_check_branch
      %20 = sbr.rel (0) target = $region5
    $region4: #{forward.1} parent=1 // pred_region
      _
    $region5: #{forward.1} parent=1 // pred_fallthru
      _
    // Predicated region
    $region6: #{forward.1} parent=1 // pred_check
      _
    $region7: #{forward.1} parent=1 // pred_check_branch
      %22 = sbr.rel (0) target = $region9
    $region8: #{forward.1} parent=1 // pred_region
      _
    $region9: #{forward.1} parent=1 // pred_fallthru
      _
    // Predicated region
    $region10: #{forward.1} parent=1 // pred_check
      _
    $region11: #{forward.1} parent=1 // pred_check_branch
      %24 = sbr.rel (0) target = $region13
    $region12: #{forward.1} parent=1 // pred_region
      _
    $region13: #{forward.1} parent=1 // pred_fallthru
      _
    // Predicated region
    $region14: #{forward.1} parent=1 // pred_check
      _
    $region15: #{forward.1} parent=1 // pred_check_branch
      %26 = sbr.rel (0) target = $region17
    $region16: #{forward.1} parent=1 // pred_region
      _
    $region17: #{forward.1} parent=1 // pred_fallthru
      _
    // Predicated region
    $region18: #{forward.1} parent=1 // pred_check
      _
    $region19: #{forward.1} parent=1 // pred_check_branch
      %28 = sbr.rel (0) target = $region21
    $region20: #{forward.1} parent=1 // pred_region
      _
    $region21: #{forward.1} parent=1 // pred_fallthru
      _
    // Predicated region
    $region22: #{forward.1} parent=1 // pred_check
      _
    $region23: #{forward.1} parent=1 // pred_check_branch
      %30 = sbr.rel (0) target = $region25
    $region24: #{forward.1} parent=1 // pred_region
      _
    $region25: #{forward.1} parent=1 // pred_fallthru
      _
    // Predicated region
    $region26: #{forward.1} parent=1 // pred_check
      _
    $region27: #{forward.1} parent=1 // pred_check_branch
      %32 = sbr.rel (0) target = $region29
    $region28: #{forward.1} parent=1 // pred_region
      _
    $region29: #{forward.1} parent=1 // pred_fallthru
      _
    // Predicated region
    $region30: #{forward.1} parent=1 // pred_check
      _
    $region31: #{forward.1} parent=1 // pred_check_branch
      %34 = sbr.rel (0) target = $region33
    $region32: #{forward.1} parent=1 // pred_region
      _
    $region33: #{forward.1} parent=1 // pred_fallthru
      _
    // Predicated region
    $region34: #{forward.1} parent=1 // pred_check
      _
    $region35: #{forward.1} parent=1 // pred_check_branch
      %36 = sbr.rel (0) target = $region37
    $region36: #{forward.1} parent=1 // pred_region
      _
    $region37: #{forward.1} parent=1 // pred_fallthru
      _
    // Predicated region
    $region38: #{forward.1} parent=1 // pred_check
      _
    $region39: #{forward.1} parent=1 // pred_check_branch
      %38 = sbr.rel (0) target = $region41
    $region40: #{forward.1} parent=1 // pred_region
      _
    $region41: #{forward.1} parent=1 // pred_fallthru
      _
    // Predicated region
    $region42: #{forward.1} parent=1 // pred_check
      _
    $region43: #{forward.1} parent=1 // pred_check_branch
      %40 = sbr.rel (0) target = $region45
    $region44: #{forward.1} parent=1 // pred_region
      _
    $region45: #{forward.1} parent=1 // pred_fallthru
      _
    // Predicated region
    $region46: #{forward.1} parent=1 // pred_check
      _
    $region47: #{forward.1} parent=1 // pred_check_branch
      %42 = sbr.rel (0) target = $region49
    $region48: #{forward.1} parent=1 // pred_region
      _
    $region49: #{forward.1} parent=1 // pred_fallthru
      _
    // Predicated region
    $region50: #{forward.1} parent=1 // pred_check
      _
    $region51: #{forward.1} parent=1 // pred_check_branch
      %44 = sbr.rel (0) target = $region53
    $region52: #{forward.1} parent=1 // pred_region
      _
    $region53: #{forward.1} parent=1 // pred_fallthru
      _
    %v46 = vld [vmem:[%s0] sm:$0xff]
    %v47 = vld [vmem:[%s0 + $0x8] sm:$0xff]
    %v48 = vld [vmem:[%s0 + $0x10] sm:$0xff]
    %v49 = vld [vmem:[%s0 + $0x18] sm:$0xff]
    %v50 = vld [vmem:[%s0 + $0x20] sm:$0xff]
    %v51 = vld [vmem:[%s0 + $0x28] sm:$0xff]
    %v52 = vld [vmem:[%s0 + $0x30] sm:$0xff]
    %v53 = vld [vmem:[%s0 + $0x38] sm:$0xff]
    %v54 = vld [vmem:[%s0 + $0x40] sm:$0xff]
    %v55 = vld [vmem:[%s0 + $0x48] sm:$0xff]
    %v56 = vld [vmem:[%s0 + $0x50] sm:$0xff]
    %v57 = vld [vmem:[%s0 + $0x58] sm:$0xff]
    %v58 = vld [vmem:[%s0 + $0x60] sm:$0xff]
    %v59 = vld [vmem:[%s0 + $0x68] sm:$0xff]
    %v60 = vld [vmem:[%s0 + $0x70] sm:$0xff]
    %v61 = vld [vmem:[%s0 + $0x78] sm:$0xff]
    %v62 = vld [vmem:[%s0 + $0x80] sm:$0xff]
    %v63 = vld [vmem:[%s0 + $0x88] sm:$0xff]
    %v64 = vld [vmem:[%s0 + $0x90] sm:$0xff]
    %v65 = vld [vmem:[%s0 + $0x98] sm:$0xff]
    %v66 = vld [vmem:[%s0 + $0xa0] sm:$0xff]
    %v67 = vld [vmem:[%s0 + $0xa8] sm:$0xff]
    %v68 = vld [vmem:[%s0 + $0xb0] sm:$0xff]
    %v69 = vld [vmem:[%s0 + $0xb8] sm:$0xff]
    %v70 = vld [vmem:[%s0 + $0xc0] sm:$0xff]
    %v71 = vld [vmem:[%s0 + $0xc8] sm:$0xff]
    %v72 = vld [vmem:[%s0 + $0xd0] sm:$0xff]
    %v73 = vld [vmem:[%s0 + $0xd8] sm:$0xff]
    %v74 = vld [vmem:[%s0 + $0xe0] sm:$0xff]
    %v75 = vld [vmem:[%s0 + $0xe8] sm:$0xff]
    %v76 = vld [vmem:[%s0 + $0xf0] sm:$0xff]
    %v77 = vld [vmem:[%s0 + $0xf8] sm:$0xff]
    %v78 = vld [vmem:[%s1] sm:$0xf]
    %v79 = vld [vmem:[%s1 + $0x4] sm:$0xf]
    %v80 = vld [vmem:[%s1 + $0x8] sm:$0xf]
    %v81 = vld [vmem:[%s1 + $0xc] sm:$0xf]
    %v82 = vld [vmem:[%s1 + $0x10] sm:$0xf]
    %v83 = vld [vmem:[%s1 + $0x14] sm:$0xf]
    %v84 = vld [vmem:[%s1 + $0x18] sm:$0xf]
    %v85 = vld [vmem:[%s1 + $0x1c] sm:$0xf]
    %v86 = vld [vmem:[%s1 + $0x20] sm:$0xf]
    %v87 = vld [vmem:[%s1 + $0x24] sm:$0xf]
    %v88 = vld [vmem:[%s1 + $0x28] sm:$0xf]
    %v89 = vld [vmem:[%s1 + $0x2c] sm:$0xf]
    %v90 = vld [vmem:[%s1 + $0x30] sm:$0xf]
    %v91 = vld [vmem:[%s1 + $0x34] sm:$0xf]
    %v92 = vld [vmem:[%s1 + $0x38] sm:$0xf]
    %v93 = vld [vmem:[%s1 + $0x3c] sm:$0xf]
    %v94 = vld [vmem:[%s1 + $0x40] sm:$0xf]
    %v95 = vld [vmem:[%s1 + $0x44] sm:$0xf]
    %v96 = vld [vmem:[%s1 + $0x48] sm:$0xf]
    %v97 = vld [vmem:[%s1 + $0x4c] sm:$0xf]
    %v98 = vld [vmem:[%s1 + $0x50] sm:$0xf]
    %v99 = vld [vmem:[%s1 + $0x54] sm:$0xf]
    %v100 = vld [vmem:[%s1 + $0x58] sm:$0xf]
    %v101 = vld [vmem:[%s1 + $0x5c] sm:$0xf]
    %v102 = vld [vmem:[%s1 + $0x60] sm:$0xf]
    %v103 = vld [vmem:[%s1 + $0x64] sm:$0xf]
    %v104 = vld [vmem:[%s1 + $0x68] sm:$0xf]
    %v105 = vld [vmem:[%s1 + $0x6c] sm:$0xf]
    %v106 = vld [vmem:[%s1 + $0x70] sm:$0xf]
    %v107 = vld [vmem:[%s1 + $0x74] sm:$0xf]
    %v108 = vld [vmem:[%s1 + $0x78] sm:$0xf]
    %v109 = vld [vmem:[%s1 + $0x7c] sm:$0xf]
    %v110 = vld [vmem:[%s2] sm:$0x1]
    %v112 = vlaneseq
    %v113 = vshrl.u32 %v112, 7
    %v114 = vsub.s32 0, %v113
    %v115 = vrot.slane %v110, %v114
    %v149 = vunpack.c.l.b16 %v46
    %v150 = vunpack.c.h.b16 %v46
    %v151 = vunpack.c.l.b16 %v47
    %v152 = vunpack.c.h.b16 %v47
    %v153 = vunpack.c.l.b16 %v48
    %v154 = vunpack.c.h.b16 %v48
    %v155 = vunpack.c.l.b16 %v49
    %v156 = vunpack.c.h.b16 %v49
    %v157 = vunpack.c.l.b16 %v50
    %v158 = vunpack.c.h.b16 %v50
    %v159 = vunpack.c.l.b16 %v51
    %v160 = vunpack.c.h.b16 %v51
    %v161 = vunpack.c.l.b16 %v52
    %v162 = vunpack.c.h.b16 %v52
    %v163 = vunpack.c.l.b16 %v53
    %v164 = vunpack.c.h.b16 %v53
    %v165 = vunpack.c.l.b16 %v54
    %v166 = vunpack.c.h.b16 %v54
    %v167 = vunpack.c.l.b16 %v55
    %v168 = vunpack.c.h.b16 %v55
    %v169 = vunpack.c.l.b16 %v56
    %v170 = vunpack.c.h.b16 %v56
    %v171 = vunpack.c.l.b16 %v57
    %v172 = vunpack.c.h.b16 %v57
    %v173 = vunpack.c.l.b16 %v58
    %v174 = vunpack.c.h.b16 %v58
    %v175 = vunpack.c.l.b16 %v59
    %v176 = vunpack.c.h.b16 %v59
    %v177 = vunpack.c.l.b16 %v60
    %v178 = vunpack.c.h.b16 %v60
    %v179 = vunpack.c.l.b16 %v61
    %v180 = vunpack.c.h.b16 %v61
    %v181 = vunpack.c.l.b16 %v62
    %v182 = vunpack.c.h.b16 %v62
    %v183 = vunpack.c.l.b16 %v63
    %v184 = vunpack.c.h.b16 %v63
    %v185 = vunpack.c.l.b16 %v64
    %v186 = vunpack.c.h.b16 %v64
    %v187 = vunpack.c.l.b16 %v65
    %v188 = vunpack.c.h.b16 %v65
    %v189 = vunpack.c.l.b16 %v66
    %v190 = vunpack.c.h.b16 %v66
    %v191 = vunpack.c.l.b16 %v67
    %v192 = vunpack.c.h.b16 %v67
    %v193 = vunpack.c.l.b16 %v68
    %v194 = vunpack.c.h.b16 %v68
    %v195 = vunpack.c.l.b16 %v69
    %v196 = vunpack.c.h.b16 %v69
    %v197 = vunpack.c.l.b16 %v70
    %v198 = vunpack.c.h.b16 %v70
    %v199 = vunpack.c.l.b16 %v71
    %v200 = vunpack.c.h.b16 %v71
    %v201 = vunpack.c.l.b16 %v72
    %v202 = vunpack.c.h.b16 %v72
    %v203 = vunpack.c.l.b16 %v73
    %v204 = vunpack.c.h.b16 %v73
    %v205 = vunpack.c.l.b16 %v74
    %v206 = vunpack.c.h.b16 %v74
    %v207 = vunpack.c.l.b16 %v75
    %v208 = vunpack.c.h.b16 %v75
    %v209 = vunpack.c.l.b16 %v76
    %v210 = vunpack.c.h.b16 %v76
    %v211 = vunpack.c.l.b16 %v77
    %v212 = vunpack.c.h.b16 %v77
    %v213 = vpack.c.b16 %v151, %v149
    %v214 = vpack.c.b16 %v152, %v150
    %v215 = vpack.c.b16 %v155, %v153
    %v216 = vpack.c.b16 %v156, %v154
    %v217 = vpack.c.b16 %v159, %v157
    %v218 = vpack.c.b16 %v160, %v158
    %v219 = vpack.c.b16 %v163, %v161
    %v220 = vpack.c.b16 %v164, %v162
    %v221 = vpack.c.b16 %v167, %v165
    %v222 = vpack.c.b16 %v168, %v166
    %v223 = vpack.c.b16 %v171, %v169
    %v224 = vpack.c.b16 %v172, %v170
    %v225 = vpack.c.b16 %v175, %v173
    %v226 = vpack.c.b16 %v176, %v174
    %v227 = vpack.c.b16 %v179, %v177
    %v228 = vpack.c.b16 %v180, %v178
    %v229 = vpack.c.b16 %v183, %v181
    %v230 = vpack.c.b16 %v184, %v182
    %v231 = vpack.c.b16 %v187, %v185
    %v232 = vpack.c.b16 %v188, %v186
    %v233 = vpack.c.b16 %v191, %v189
    %v234 = vpack.c.b16 %v192, %v190
    %v235 = vpack.c.b16 %v195, %v193
    %v236 = vpack.c.b16 %v196, %v194
    %v237 = vpack.c.b16 %v199, %v197
    %v238 = vpack.c.b16 %v200, %v198
    %v239 = vpack.c.b16 %v203, %v201
    %v240 = vpack.c.b16 %v204, %v202
    %v241 = vpack.c.b16 %v207, %v205
    %v242 = vpack.c.b16 %v208, %v206
    %v243 = vpack.c.b16 %v211, %v209
    %v244 = vpack.c.b16 %v212, %v210
    %v309 = vunpack.c.l.b16 %v78
    %v310 = vunpack.c.l.b16 %v79
    %v311 = vunpack.c.l.b16 %v80
    %v312 = vunpack.c.l.b16 %v81
    %v313 = vunpack.c.l.b16 %v82
    %v314 = vunpack.c.l.b16 %v83
    %v315 = vunpack.c.l.b16 %v84
    %v316 = vunpack.c.l.b16 %v85
    %v317 = vunpack.c.l.b16 %v86
    %v318 = vunpack.c.l.b16 %v87
    %v319 = vunpack.c.l.b16 %v88
    %v320 = vunpack.c.l.b16 %v89
    %v321 = vunpack.c.l.b16 %v90
    %v322 = vunpack.c.l.b16 %v91
    %v323 = vunpack.c.l.b16 %v92
    %v324 = vunpack.c.l.b16 %v93
    %v325 = vunpack.c.l.b16 %v94
    %v326 = vunpack.c.l.b16 %v95
    %v327 = vunpack.c.l.b16 %v96
    %v328 = vunpack.c.l.b16 %v97
    %v329 = vunpack.c.l.b16 %v98
    %v330 = vunpack.c.l.b16 %v99
    %v331 = vunpack.c.l.b16 %v100
    %v332 = vunpack.c.l.b16 %v101
    %v333 = vunpack.c.l.b16 %v102
    %v334 = vunpack.c.l.b16 %v103
    %v335 = vunpack.c.l.b16 %v104
    %v336 = vunpack.c.l.b16 %v105
    %v337 = vunpack.c.l.b16 %v106
    %v338 = vunpack.c.l.b16 %v107
    %v339 = vunpack.c.l.b16 %v108
    %v340 = vunpack.c.l.b16 %v109
    %v341 = vpack.c.b16 %v310, %v309
    %v342 = vpack.c.b16 %v312, %v311
    %v343 = vpack.c.b16 %v314, %v313
    %v344 = vpack.c.b16 %v316, %v315
    %v345 = vpack.c.b16 %v318, %v317
    %v346 = vpack.c.b16 %v320, %v319
    %v347 = vpack.c.b16 %v322, %v321
    %v348 = vpack.c.b16 %v324, %v323
    %v349 = vpack.c.b16 %v326, %v325
    %v350 = vpack.c.b16 %v328, %v327
    %v351 = vpack.c.b16 %v330, %v329
    %v352 = vpack.c.b16 %v332, %v331
    %v353 = vpack.c.b16 %v334, %v333
    %v354 = vpack.c.b16 %v336, %v335
    %v355 = vpack.c.b16 %v338, %v337
    %v356 = vpack.c.b16 %v340, %v339
    %373 = vmatprep.subr.bf16.mxu0 0
    %374 = vmatpush1.bf16.msra.mxu0 %v341
    %375 = vmatprep.subr.bf16.mxu0 0
    %376 = vmatpush1.bf16.msra.mxu0 %v342
    %377 = vmatprep.subr.bf16.mxu0 0
    %378 = vmatpush1.bf16.msra.mxu0 %v343
    %379 = vmatprep.subr.bf16.mxu0 0
    %380 = vmatpush1.bf16.msra.mxu0 %v344
    %381 = vmatprep.subr.bf16.mxu0 0
    %382 = vmatpush1.bf16.msra.mxu0 %v345
    %383 = vmatprep.subr.bf16.mxu0 0
    %384 = vmatpush1.bf16.msra.mxu0 %v346
    %385 = vmatprep.subr.bf16.mxu0 0
    %386 = vmatpush1.bf16.msra.mxu0 %v347
    %387 = vmatprep.subr.bf16.mxu0 0
    %388 = vmatpush1.bf16.msra.mxu0 %v348
    %389 = vmatprep.subr.bf16.mxu0 0
    %390 = vmatpush1.bf16.msra.mxu0 %v349
    %391 = vmatprep.subr.bf16.mxu0 0
    %392 = vmatpush1.bf16.msra.mxu0 %v350
    %393 = vmatprep.subr.bf16.mxu0 0
    %394 = vmatpush1.bf16.msra.mxu0 %v351
    %395 = vmatprep.subr.bf16.mxu0 0
    %396 = vmatpush1.bf16.msra.mxu0 %v352
    %397 = vmatprep.subr.bf16.mxu0 0
    %398 = vmatpush1.bf16.msra.mxu0 %v353
    %399 = vmatprep.subr.bf16.mxu0 0
    %400 = vmatpush1.bf16.msra.mxu0 %v354
    %401 = vmatprep.subr.bf16.mxu0 0
    %402 = vmatpush1.bf16.msra.mxu0 %v355
    %403 = vmatprep.subr.bf16.mxu0 0
    %404 = vmatpush1.bf16.msra.mxu0 %v356
    %405 = vmatprep.mubr.bf16.mxu0 %v214
    %406 = vmatmul.mubr.bf16.gmra.mrb[0].mxu0 %v213
    %v407 = vpop.f32.mrb[0].mxu0
    %v408 = vadd.f32 %v115, %v407
    %v409 = vpop.f32.mrb[0].mxu0
    %v410 = vpop.f32.mrb[0].mxu0
    %v411 = vadd.f32 %v115, %v410
    %v412 = vpop.f32.mrb[0].mxu0
    %413 = vmatprep.mubr.bf16.mxu0 %v216
    %414 = vmatmul.mubr.bf16.gmra.mrb[0].mxu0 %v215
    %v415 = vpop.f32.mrb[0].mxu0
    %v416 = vadd.f32 %v115, %v415
    %v417 = vpop.f32.mrb[0].mxu0
    %v418 = vpop.f32.mrb[0].mxu0
    %v419 = vadd.f32 %v115, %v418
    %v420 = vpop.f32.mrb[0].mxu0
    %421 = vmatprep.mubr.bf16.mxu0 %v218
    %422 = vmatmul.mubr.bf16.gmra.mrb[0].mxu0 %v217
    %v423 = vpop.f32.mrb[0].mxu0
    %v424 = vadd.f32 %v115, %v423
    %v425 = vpop.f32.mrb[0].mxu0
    %v426 = vpop.f32.mrb[0].mxu0
    %v427 = vadd.f32 %v115, %v426
    %v428 = vpop.f32.mrb[0].mxu0
    %429 = vmatprep.mubr.bf16.mxu0 %v220
    %430 = vmatmul.mubr.bf16.gmra.mrb[0].mxu0 %v219
    %v431 = vpop.f32.mrb[0].mxu0
    %v432 = vadd.f32 %v115, %v431
    %v433 = vpop.f32.mrb[0].mxu0
    %v434 = vpop.f32.mrb[0].mxu0
    %v435 = vadd.f32 %v115, %v434
    %v436 = vpop.f32.mrb[0].mxu0
    %437 = vmatprep.mubr.bf16.mxu0 %v222
    %438 = vmatmul.mubr.bf16.gmra.mrb[0].mxu0 %v221
    %v439 = vpop.f32.mrb[0].mxu0
    %v440 = vadd.f32 %v115, %v439
    %v441 = vpop.f32.mrb[0].mxu0
    %v442 = vpop.f32.mrb[0].mxu0
    %v443 = vadd.f32 %v115, %v442
    %v444 = vpop.f32.mrb[0].mxu0
    %445 = vmatprep.mubr.bf16.mxu0 %v224
    %446 = vmatmul.mubr.bf16.gmra.mrb[0].mxu0 %v223
    %v447 = vpop.f32.mrb[0].mxu0
    %v448 = vadd.f32 %v115, %v447
    %v449 = vpop.f32.mrb[0].mxu0
    %v450 = vpop.f32.mrb[0].mxu0
    %v451 = vadd.f32 %v115, %v450
    %v452 = vpop.f32.mrb[0].mxu0
    %453 = vmatprep.mubr.bf16.mxu0 %v226
    %454 = vmatmul.mubr.bf16.gmra.mrb[0].mxu0 %v225
    %v455 = vpop.f32.mrb[0].mxu0
    %v456 = vadd.f32 %v115, %v455
    %v457 = vpop.f32.mrb[0].mxu0
    %v458 = vpop.f32.mrb[0].mxu0
    %v459 = vadd.f32 %v115, %v458
    %v460 = vpop.f32.mrb[0].mxu0
    %461 = vmatprep.mubr.bf16.mxu0 %v228
    %462 = vmatmul.mubr.bf16.gmra.mrb[0].mxu0 %v227
    %v463 = vpop.f32.mrb[0].mxu0
    %v464 = vadd.f32 %v115, %v463
    %v465 = vpop.f32.mrb[0].mxu0
    %v466 = vpop.f32.mrb[0].mxu0
    %v467 = vadd.f32 %v115, %v466
    %v468 = vpop.f32.mrb[0].mxu0
    %469 = vmatprep.mubr.bf16.mxu0 %v230
    %470 = vmatmul.mubr.bf16.gmra.mrb[0].mxu0 %v229
    %v471 = vpop.f32.mrb[0].mxu0
    %v472 = vadd.f32 %v115, %v471
    %v473 = vpop.f32.mrb[0].mxu0
    %v474 = vpop.f32.mrb[0].mxu0
    %v475 = vadd.f32 %v115, %v474
    %v476 = vpop.f32.mrb[0].mxu0
    %477 = vmatprep.mubr.bf16.mxu0 %v232
    %478 = vmatmul.mubr.bf16.gmra.mrb[0].mxu0 %v231
    %v479 = vpop.f32.mrb[0].mxu0
    %v480 = vadd.f32 %v115, %v479
    %v481 = vpop.f32.mrb[0].mxu0
    %v482 = vpop.f32.mrb[0].mxu0
    %v483 = vadd.f32 %v115, %v482
    %v484 = vpop.f32.mrb[0].mxu0
    %485 = vmatprep.mubr.bf16.mxu0 %v234
    %486 = vmatmul.mubr.bf16.gmra.mrb[0].mxu0 %v233
    %v487 = vpop.f32.mrb[0].mxu0
    %v488 = vadd.f32 %v115, %v487
    %v489 = vpop.f32.mrb[0].mxu0
    %v490 = vpop.f32.mrb[0].mxu0
    %v491 = vadd.f32 %v115, %v490
    %v492 = vpop.f32.mrb[0].mxu0
    %493 = vmatprep.mubr.bf16.mxu0 %v236
    %494 = vmatmul.mubr.bf16.gmra.mrb[0].mxu0 %v235
    %v495 = vpop.f32.mrb[0].mxu0
    %v496 = vadd.f32 %v115, %v495
    %v497 = vpop.f32.mrb[0].mxu0
    %v498 = vpop.f32.mrb[0].mxu0
    %v499 = vadd.f32 %v115, %v498
    %v500 = vpop.f32.mrb[0].mxu0
    %501 = vmatprep.mubr.bf16.mxu0 %v238
    %502 = vmatmul.mubr.bf16.gmra.mrb[0].mxu0 %v237
    %v503 = vpop.f32.mrb[0].mxu0
    %v504 = vadd.f32 %v115, %v503
    %v505 = vpop.f32.mrb[0].mxu0
    %v506 = vpop.f32.mrb[0].mxu0
    %v507 = vadd.f32 %v115, %v506
    %v508 = vpop.f32.mrb[0].mxu0
    %509 = vmatprep.mubr.bf16.mxu0 %v240
    %510 = vmatmul.mubr.bf16.gmra.mrb[0].mxu0 %v239
    %v511 = vpop.f32.mrb[0].mxu0
    %v512 = vadd.f32 %v115, %v511
    %v513 = vpop.f32.mrb[0].mxu0
    %v514 = vpop.f32.mrb[0].mxu0
    %v515 = vadd.f32 %v115, %v514
    %v516 = vpop.f32.mrb[0].mxu0
    %517 = vmatprep.mubr.bf16.mxu0 %v242
    %518 = vmatmul.mubr.bf16.gmra.mrb[0].mxu0 %v241
    %v519 = vpop.f32.mrb[0].mxu0
    %v520 = vadd.f32 %v115, %v519
    %v521 = vpop.f32.mrb[0].mxu0
    %v522 = vpop.f32.mrb[0].mxu0
    %v523 = vadd.f32 %v115, %v522
    %v524 = vpop.f32.mrb[0].mxu0
    %525 = vmatprep.mubr.bf16.mxu0 %v244
    %526 = vmatmul.mubr.bf16.gmra.mrb[0].mxu0 %v243
    %v527 = vpop.f32.mrb[0].mxu0
    %v528 = vadd.f32 %v115, %v527
    %v529 = vpop.f32.mrb[0].mxu0
    %v530 = vpop.f32.mrb[0].mxu0
    %v531 = vadd.f32 %v115, %v530
    %v532 = vpop.f32.mrb[0].mxu0
    %533 = vdwg.mxu0
    %v534 = vmax.f32 %v408, 0.0
    %v535 = vmax.f32 %v411, 0.0
    %v536 = vmax.f32 %v416, 0.0
    %v537 = vmax.f32 %v419, 0.0
    %v538 = vmax.f32 %v424, 0.0
    %v539 = vmax.f32 %v427, 0.0
    %v540 = vmax.f32 %v432, 0.0
    %v541 = vmax.f32 %v435, 0.0
    %v542 = vmax.f32 %v440, 0.0
    %v543 = vmax.f32 %v443, 0.0
    %v544 = vmax.f32 %v448, 0.0
    %v545 = vmax.f32 %v451, 0.0
    %v546 = vmax.f32 %v456, 0.0
    %v547 = vmax.f32 %v459, 0.0
    %v548 = vmax.f32 %v464, 0.0
    %v549 = vmax.f32 %v467, 0.0
    %v550 = vmax.f32 %v472, 0.0
    %v551 = vmax.f32 %v475, 0.0
    %v552 = vmax.f32 %v480, 0.0
    %v553 = vmax.f32 %v483, 0.0
    %v554 = vmax.f32 %v488, 0.0
    %v555 = vmax.f32 %v491, 0.0
    %v556 = vmax.f32 %v496, 0.0
    %v557 = vmax.f32 %v499, 0.0
    %v558 = vmax.f32 %v504, 0.0
    %v559 = vmax.f32 %v507, 0.0
    %v560 = vmax.f32 %v512, 0.0
    %v561 = vmax.f32 %v515, 0.0
    %v562 = vmax.f32 %v520, 0.0
    %v563 = vmax.f32 %v523, 0.0
    %v564 = vmax.f32 %v528, 0.0
    %v565 = vmax.f32 %v531, 0.0
    %v566 = vpack.c.bf16 %v535, %v534
    %v567 = vpack.c.bf16 %v537, %v536
    %v568 = vpack.c.bf16 %v539, %v538
    %v569 = vpack.c.bf16 %v541, %v540
    %v570 = vpack.c.bf16 %v543, %v542
    %v571 = vpack.c.bf16 %v545, %v544
    %v572 = vpack.c.bf16 %v547, %v546
    %v573 = vpack.c.bf16 %v549, %v548
    %v574 = vpack.c.bf16 %v551, %v550
    %v575 = vpack.c.bf16 %v553, %v552
    %v576 = vpack.c.bf16 %v555, %v554
    %v577 = vpack.c.bf16 %v557, %v556
    %v578 = vpack.c.bf16 %v559, %v558
    %v579 = vpack.c.bf16 %v561, %v560
    %v580 = vpack.c.bf16 %v563, %v562
    %v581 = vpack.c.bf16 %v565, %v564
    %v582 = vld [vmem:[%s3] sm:$0xf]
    %v583 = vld [vmem:[%s3 + $0x4] sm:$0xf]
    %v584 = vld [vmem:[%s3 + $0x8] sm:$0xf]
    %v585 = vld [vmem:[%s3 + $0xc] sm:$0xf]
    %v586 = vld [vmem:[%s3 + $0x10] sm:$0xf]
    %v587 = vld [vmem:[%s3 + $0x14] sm:$0xf]
    %v588 = vld [vmem:[%s3 + $0x18] sm:$0xf]
    %v589 = vld [vmem:[%s3 + $0x1c] sm:$0xf]
    %v590 = vld [vmem:[%s3 + $0x20] sm:$0xf]
    %v591 = vld [vmem:[%s3 + $0x24] sm:$0xf]
    %v592 = vld [vmem:[%s3 + $0x28] sm:$0xf]
    %v593 = vld [vmem:[%s3 + $0x2c] sm:$0xf]
    %v594 = vld [vmem:[%s3 + $0x30] sm:$0xf]
    %v595 = vld [vmem:[%s3 + $0x34] sm:$0xf]
    %v596 = vld [vmem:[%s3 + $0x38] sm:$0xf]
    %v597 = vld [vmem:[%s3 + $0x3c] sm:$0xf]
    %v598 = vld [vmem:[%s4] sm:$0x1]
    %v600 = vlaneseq
    %v601 = vshrl.u32 %v600, 7
    %v602 = vsub.s32 0, %v601
    %v603 = vrot.slane %v598, %v602
    %v621 = vunpack.c.l.b16 %v582
    %v622 = vunpack.c.l.b16 %v583
    %v623 = vunpack.c.l.b16 %v584
    %v624 = vunpack.c.l.b16 %v585
    %v625 = vunpack.c.l.b16 %v586
    %v626 = vunpack.c.l.b16 %v587
    %v627 = vunpack.c.l.b16 %v588
    %v628 = vunpack.c.l.b16 %v589
    %v629 = vunpack.c.l.b16 %v590
    %v630 = vunpack.c.l.b16 %v591
    %v631 = vunpack.c.l.b16 %v592
    %v632 = vunpack.c.l.b16 %v593
    %v633 = vunpack.c.l.b16 %v594
    %v634 = vunpack.c.l.b16 %v595
    %v635 = vunpack.c.l.b16 %v596
    %v636 = vunpack.c.l.b16 %v597
    %v637 = vpack.c.b16 %v622, %v621
    %v638 = vpack.c.b16 %v624, %v623
    %v639 = vpack.c.b16 %v626, %v625
    %v640 = vpack.c.b16 %v628, %v627
    %v641 = vpack.c.b16 %v630, %v629
    %v642 = vpack.c.b16 %v632, %v631
    %v643 = vpack.c.b16 %v634, %v633
    %v644 = vpack.c.b16 %v636, %v635
    %653 = vmatprep.subr.bf16.mxu0 0
    %654 = vmatpush1.bf16.msra.mxu0 %v637
    %655 = vmatprep.subr.bf16.mxu0 0
    %656 = vmatpush1.bf16.msra.mxu0 %v638
    %657 = vmatprep.subr.bf16.mxu0 0
    %658 = vmatpush1.bf16.msra.mxu0 %v639
    %659 = vmatprep.subr.bf16.mxu0 0
    %660 = vmatpush1.bf16.msra.mxu0 %v640
    %661 = vmatprep.subr.bf16.mxu0 0
    %662 = vmatpush1.bf16.msra.mxu0 %v641
    %663 = vmatprep.subr.bf16.mxu0 0
    %664 = vmatpush1.bf16.msra.mxu0 %v642
    %665 = vmatprep.subr.bf16.mxu0 0
    %666 = vmatpush1.bf16.msra.mxu0 %v643
    %667 = vmatprep.subr.bf16.mxu0 0
    %668 = vmatpush1.bf16.msra.mxu0 %v644
    %669 = vmatprep.subr.bf16.mxu0 0
    %670 = vmatpush1.bf16.msra.mxu0 0
    %671 = vmatprep.subr.bf16.mxu0 0
    %672 = vmatpush1.bf16.msra.mxu0 0
    %673 = vmatprep.subr.bf16.mxu0 0
    %674 = vmatpush1.bf16.msra.mxu0 0
    %675 = vmatprep.subr.bf16.mxu0 0
    %676 = vmatpush1.bf16.msra.mxu0 0
    %677 = vmatprep.subr.bf16.mxu0 0
    %678 = vmatpush1.bf16.msra.mxu0 0
    %679 = vmatprep.subr.bf16.mxu0 0
    %680 = vmatpush1.bf16.msra.mxu0 0
    %681 = vmatprep.subr.bf16.mxu0 0
    %682 = vmatpush1.bf16.msra.mxu0 0
    %683 = vmatprep.subr.bf16.mxu0 0
    %684 = vmatpush1.bf16.msra.mxu0 0
    %685 = vmatprep.mubr.bf16.mxu0 0
    %686 = vmatmul.mubr.bf16.gmra.mrb[0].mxu0 %v566
    %v687 = vpop.f32.mrb[0].mxu0
    %v688 = vadd.f32 %v603, %v687
    %v689 = vpop.f32.mrb[0].mxu0
    %v690 = vpop.f32.mrb[0].mxu0
    %v691 = vadd.f32 %v603, %v690
    %v692 = vpop.f32.mrb[0].mxu0
    %693 = vmatprep.mubr.bf16.mxu0 0
    %694 = vmatmul.mubr.bf16.gmra.mrb[0].mxu0 %v567
    %v695 = vpop.f32.mrb[0].mxu0
    %v696 = vadd.f32 %v603, %v695
    %v697 = vpop.f32.mrb[0].mxu0
    %v698 = vpop.f32.mrb[0].mxu0
    %v699 = vadd.f32 %v603, %v698
    %v700 = vpop.f32.mrb[0].mxu0
    %701 = vmatprep.mubr.bf16.mxu0 0
    %702 = vmatmul.mubr.bf16.gmra.mrb[0].mxu0 %v568
    %v703 = vpop.f32.mrb[0].mxu0
    %v704 = vadd.f32 %v603, %v703
    %v705 = vpop.f32.mrb[0].mxu0
    %v706 = vpop.f32.mrb[0].mxu0
    %v707 = vadd.f32 %v603, %v706
    %v708 = vpop.f32.mrb[0].mxu0
    %709 = vmatprep.mubr.bf16.mxu0 0
    %710 = vmatmul.mubr.bf16.gmra.mrb[0].mxu0 %v569
    %v711 = vpop.f32.mrb[0].mxu0
    %v712 = vadd.f32 %v603, %v711
    %v713 = vpop.f32.mrb[0].mxu0
    %v714 = vpop.f32.mrb[0].mxu0
    %v715 = vadd.f32 %v603, %v714
    %v716 = vpop.f32.mrb[0].mxu0
    %717 = vmatprep.mubr.bf16.mxu0 0
    %718 = vmatmul.mubr.bf16.gmra.mrb[0].mxu0 %v570
    %v719 = vpop.f32.mrb[0].mxu0
    %v720 = vadd.f32 %v603, %v719
    %v721 = vpop.f32.mrb[0].mxu0
    %v722 = vpop.f32.mrb[0].mxu0
    %v723 = vadd.f32 %v603, %v722
    %v724 = vpop.f32.mrb[0].mxu0
    %725 = vmatprep.mubr.bf16.mxu0 0
    %726 = vmatmul.mubr.bf16.gmra.mrb[0].mxu0 %v571
    %v727 = vpop.f32.mrb[0].mxu0
    %v728 = vadd.f32 %v603, %v727
    %v729 = vpop.f32.mrb[0].mxu0
    %v730 = vpop.f32.mrb[0].mxu0
    %v731 = vadd.f32 %v603, %v730
    %v732 = vpop.f32.mrb[0].mxu0
    %733 = vmatprep.mubr.bf16.mxu0 0
    %734 = vmatmul.mubr.bf16.gmra.mrb[0].mxu0 %v572
    %v735 = vpop.f32.mrb[0].mxu0
    %v736 = vadd.f32 %v603, %v735
    %v737 = vpop.f32.mrb[0].mxu0
    %v738 = vpop.f32.mrb[0].mxu0
    %v739 = vadd.f32 %v603, %v738
    %v740 = vpop.f32.mrb[0].mxu0
    %741 = vmatprep.mubr.bf16.mxu0 0
    %742 = vmatmul.mubr.bf16.gmra.mrb[0].mxu0 %v573
    %v743 = vpop.f32.mrb[0].mxu0
    %v744 = vadd.f32 %v603, %v743
    %v745 = vpop.f32.mrb[0].mxu0
    %v746 = vpop.f32.mrb[0].mxu0
    %v747 = vadd.f32 %v603, %v746
    %v748 = vpop.f32.mrb[0].mxu0
    %749 = vmatprep.mubr.bf16.mxu0 0
    %750 = vmatmul.mubr.bf16.gmra.mrb[0].mxu0 %v574
    %v751 = vpop.f32.mrb[0].mxu0
    %v752 = vadd.f32 %v603, %v751
    %v753 = vpop.f32.mrb[0].mxu0
    %v754 = vpop.f32.mrb[0].mxu0
    %v755 = vadd.f32 %v603, %v754
    %v756 = vpop.f32.mrb[0].mxu0
    %757 = vmatprep.mubr.bf16.mxu0 0
    %758 = vmatmul.mubr.bf16.gmra.mrb[0].mxu0 %v575
    %v759 = vpop.f32.mrb[0].mxu0
    %v760 = vadd.f32 %v603, %v759
    %v761 = vpop.f32.mrb[0].mxu0
    %v762 = vpop.f32.mrb[0].mxu0
    %v763 = vadd.f32 %v603, %v762
    %v764 = vpop.f32.mrb[0].mxu0
    %765 = vmatprep.mubr.bf16.mxu0 0
    %766 = vmatmul.mubr.bf16.gmra.mrb[0].mxu0 %v576
    %v767 = vpop.f32.mrb[0].mxu0
    %v768 = vadd.f32 %v603, %v767
    %v769 = vpop.f32.mrb[0].mxu0
    %v770 = vpop.f32.mrb[0].mxu0
    %v771 = vadd.f32 %v603, %v770
    %v772 = vpop.f32.mrb[0].mxu0
    %773 = vmatprep.mubr.bf16.mxu0 0
    %774 = vmatmul.mubr.bf16.gmra.mrb[0].mxu0 %v577
    %v775 = vpop.f32.mrb[0].mxu0
    %v776 = vadd.f32 %v603, %v775
    %v777 = vpop.f32.mrb[0].mxu0
    %v778 = vpop.f32.mrb[0].mxu0
    %v779 = vadd.f32 %v603, %v778
    %v780 = vpop.f32.mrb[0].mxu0
    %781 = vmatprep.mubr.bf16.mxu0 0
    %782 = vmatmul.mubr.bf16.gmra.mrb[0].mxu0 %v578
    %v783 = vpop.f32.mrb[0].mxu0
    %v784 = vadd.f32 %v603, %v783
    %v785 = vpop.f32.mrb[0].mxu0
    %v786 = vpop.f32.mrb[0].mxu0
    %v787 = vadd.f32 %v603, %v786
    %v788 = vpop.f32.mrb[0].mxu0
    %789 = vmatprep.mubr.bf16.mxu0 0
    %790 = vmatmul.mubr.bf16.gmra.mrb[0].mxu0 %v579
    %v791 = vpop.f32.mrb[0].mxu0
    %v792 = vadd.f32 %v603, %v791
    %v793 = vpop.f32.mrb[0].mxu0
    %v794 = vpop.f32.mrb[0].mxu0
    %v795 = vadd.f32 %v603, %v794
    %v796 = vpop.f32.mrb[0].mxu0
    %797 = vmatprep.mubr.bf16.mxu0 0
    %798 = vmatmul.mubr.bf16.gmra.mrb[0].mxu0 %v580
    %v799 = vpop.f32.mrb[0].mxu0
    %v800 = vadd.f32 %v603, %v799
    %v801 = vpop.f32.mrb[0].mxu0
    %v802 = vpop.f32.mrb[0].mxu0
    %v803 = vadd.f32 %v603, %v802
    %v804 = vpop.f32.mrb[0].mxu0
    %805 = vmatprep.mubr.bf16.mxu0 0
    %806 = vmatmul.mubr.bf16.gmra.mrb[0].mxu0 %v581
    %v807 = vpop.f32.mrb[0].mxu0
    %v808 = vadd.f32 %v603, %v807
    %v809 = vpop.f32.mrb[0].mxu0
    %v810 = vpop.f32.mrb[0].mxu0
    %v811 = vadd.f32 %v603, %v810
    %v812 = vpop.f32.mrb[0].mxu0
    %813 = vdwg.mxu0
    %v814 = vmax.f32 %v688, 0.0
    %v815 = vmax.f32 %v691, 0.0
    %v816 = vmax.f32 %v696, 0.0
    %v817 = vmax.f32 %v699, 0.0
    %v818 = vmax.f32 %v704, 0.0
    %v819 = vmax.f32 %v707, 0.0
    %v820 = vmax.f32 %v712, 0.0
    %v821 = vmax.f32 %v715, 0.0
    %v822 = vmax.f32 %v720, 0.0
    %v823 = vmax.f32 %v723, 0.0
    %v824 = vmax.f32 %v728, 0.0
    %v825 = vmax.f32 %v731, 0.0
    %v826 = vmax.f32 %v736, 0.0
    %v827 = vmax.f32 %v739, 0.0
    %v828 = vmax.f32 %v744, 0.0
    %v829 = vmax.f32 %v747, 0.0
    %v830 = vmax.f32 %v752, 0.0
    %v831 = vmax.f32 %v755, 0.0
    %v832 = vmax.f32 %v760, 0.0
    %v833 = vmax.f32 %v763, 0.0
    %v834 = vmax.f32 %v768, 0.0
    %v835 = vmax.f32 %v771, 0.0
    %v836 = vmax.f32 %v776, 0.0
    %v837 = vmax.f32 %v779, 0.0
    %v838 = vmax.f32 %v784, 0.0
    %v839 = vmax.f32 %v787, 0.0
    %v840 = vmax.f32 %v792, 0.0
    %v841 = vmax.f32 %v795, 0.0
    %v842 = vmax.f32 %v800, 0.0
    %v843 = vmax.f32 %v803, 0.0
    %v844 = vmax.f32 %v808, 0.0
    %v845 = vmax.f32 %v811, 0.0
    %v846 = vpack.c.bf16 %v815, %v814
    %v847 = vpack.c.bf16 %v817, %v816
    %v848 = vpack.c.bf16 %v819, %v818
    %v849 = vpack.c.bf16 %v821, %v820
    %v850 = vpack.c.bf16 %v823, %v822
    %v851 = vpack.c.bf16 %v825, %v824
    %v852 = vpack.c.bf16 %v827, %v826
    %v853 = vpack.c.bf16 %v829, %v828
    %v854 = vpack.c.bf16 %v831, %v830
    %v855 = vpack.c.bf16 %v833, %v832
    %v856 = vpack.c.bf16 %v835, %v834
    %v857 = vpack.c.bf16 %v837, %v836
    %v858 = vpack.c.bf16 %v839, %v838
    %v859 = vpack.c.bf16 %v841, %v840
    %v860 = vpack.c.bf16 %v843, %v842
    %v861 = vpack.c.bf16 %v845, %v844
    %v862 = vld [vmem:[%s5] sm:$0xf]
    %v863 = vld [vmem:[%s5 + $0x4] sm:$0xf]
    %v864 = vld [vmem:[%s5 + $0x8] sm:$0xf]
    %v865 = vld [vmem:[%s5 + $0xc] sm:$0xf]
    %v866 = vld [vmem:[%s5 + $0x10] sm:$0xf]
    %v867 = vld [vmem:[%s5 + $0x14] sm:$0xf]
    %v868 = vld [vmem:[%s5 + $0x18] sm:$0xf]
    %v869 = vld [vmem:[%s5 + $0x1c] sm:$0xf]
    %v870 = vld [vmem:[%s5 + $0x20] sm:$0xf]
    %v871 = vld [vmem:[%s5 + $0x24] sm:$0xf]
    %v872 = vld [vmem:[%s5 + $0x28] sm:$0xf]
    %v873 = vld [vmem:[%s5 + $0x2c] sm:$0xf]
    %v874 = vld [vmem:[%s5 + $0x30] sm:$0xf]
    %v875 = vld [vmem:[%s5 + $0x34] sm:$0xf]
    %v876 = vld [vmem:[%s5 + $0x38] sm:$0xf]
    %v877 = vld [vmem:[%s5 + $0x3c] sm:$0xf]
    %v878 = vld [vmem:[%s6] sm:$0x1]
    %v880 = vlaneseq
    %v881 = vshrl.u32 %v880, 7
    %v882 = vsub.s32 0, %v881
    %v883 = vrot.slane %v878, %v882
    %v901 = vunpack.c.l.b16 %v862
    %v902 = vunpack.c.l.b16 %v863
    %v903 = vunpack.c.l.b16 %v864
    %v904 = vunpack.c.l.b16 %v865
    %v905 = vunpack.c.l.b16 %v866
    %v906 = vunpack.c.l.b16 %v867
    %v907 = vunpack.c.l.b16 %v868
    %v908 = vunpack.c.l.b16 %v869
    %v909 = vunpack.c.l.b16 %v870
    %v910 = vunpack.c.l.b16 %v871
    %v911 = vunpack.c.l.b16 %v872
    %v912 = vunpack.c.l.b16 %v873
    %v913 = vunpack.c.l.b16 %v874
    %v914 = vunpack.c.l.b16 %v875
    %v915 = vunpack.c.l.b16 %v876
    %v916 = vunpack.c.l.b16 %v877
    %v917 = vpack.c.b16 %v902, %v901
    %v918 = vpack.c.b16 %v904, %v903
    %v919 = vpack.c.b16 %v906, %v905
    %v920 = vpack.c.b16 %v908, %v907
    %v921 = vpack.c.b16 %v910, %v909
    %v922 = vpack.c.b16 %v912, %v911
    %v923 = vpack.c.b16 %v914, %v913
    %v924 = vpack.c.b16 %v916, %v915
    %933 = vmatprep.subr.bf16.mxu0 0
    %934 = vmatpush1.bf16.msra.mxu0 %v917
    %935 = vmatprep.subr.bf16.mxu0 0
    %936 = vmatpush1.bf16.msra.mxu0 %v918
    %937 = vmatprep.subr.bf16.mxu0 0
    %938 = vmatpush1.bf16.msra.mxu0 %v919
    %939 = vmatprep.subr.bf16.mxu0 0
    %940 = vmatpush1.bf16.msra.mxu0 %v920
    %941 = vmatprep.subr.bf16.mxu0 0
    %942 = vmatpush1.bf16.msra.mxu0 %v921
    %943 = vmatprep.subr.bf16.mxu0 0
    %944 = vmatpush1.bf16.msra.mxu0 %v922
    %945 = vmatprep.subr.bf16.mxu0 0
    %946 = vmatpush1.bf16.msra.mxu0 %v923
    %947 = vmatprep.subr.bf16.mxu0 0
    %948 = vmatpush1.bf16.msra.mxu0 %v924
    %949 = vmatprep.subr.bf16.mxu0 0
    %950 = vmatpush1.bf16.msra.mxu0 0
    %951 = vmatprep.subr.bf16.mxu0 0
    %952 = vmatpush1.bf16.msra.mxu0 0
    %953 = vmatprep.subr.bf16.mxu0 0
    %954 = vmatpush1.bf16.msra.mxu0 0
    %955 = vmatprep.subr.bf16.mxu0 0
    %956 = vmatpush1.bf16.msra.mxu0 0
    %957 = vmatprep.subr.bf16.mxu0 0
    %958 = vmatpush1.bf16.msra.mxu0 0
    %959 = vmatprep.subr.bf16.mxu0 0
    %960 = vmatpush1.bf16.msra.mxu0 0
    %961 = vmatprep.subr.bf16.mxu0 0
    %962 = vmatpush1.bf16.msra.mxu0 0
    %963 = vmatprep.subr.bf16.mxu0 0
    %964 = vmatpush1.bf16.msra.mxu0 0
    %965 = vmatprep.mubr.bf16.mxu0 0
    %966 = vmatmul.mubr.bf16.gmra.mrb[0].mxu0 %v846
    %v967 = vpop.f32.mrb[0].mxu0
    %v968 = vadd.f32 %v883, %v967
    %v969 = vpop.f32.mrb[0].mxu0
    %v970 = vpop.f32.mrb[0].mxu0
    %v971 = vadd.f32 %v883, %v970
    %v972 = vpop.f32.mrb[0].mxu0
    %973 = vmatprep.mubr.bf16.mxu0 0
    %974 = vmatmul.mubr.bf16.gmra.mrb[0].mxu0 %v847
    %v975 = vpop.f32.mrb[0].mxu0
    %v976 = vadd.f32 %v883, %v975
    %v977 = vpop.f32.mrb[0].mxu0
    %v978 = vpop.f32.mrb[0].mxu0
    %v979 = vadd.f32 %v883, %v978
    %v980 = vpop.f32.mrb[0].mxu0
    %981 = vmatprep.mubr.bf16.mxu0 0
    %982 = vmatmul.mubr.bf16.gmra.mrb[0].mxu0 %v848
    %v983 = vpop.f32.mrb[0].mxu0
    %v984 = vadd.f32 %v883, %v983
    %v985 = vpop.f32.mrb[0].mxu0
    %v986 = vpop.f32.mrb[0].mxu0
    %v987 = vadd.f32 %v883, %v986
    %v988 = vpop.f32.mrb[0].mxu0
    %989 = vmatprep.mubr.bf16.mxu0 0
    %990 = vmatmul.mubr.bf16.gmra.mrb[0].mxu0 %v849
    %v991 = vpop.f32.mrb[0].mxu0
    %v992 = vadd.f32 %v883, %v991
    %v993 = vpop.f32.mrb[0].mxu0
    %v994 = vpop.f32.mrb[0].mxu0
    %v995 = vadd.f32 %v883, %v994
    %v996 = vpop.f32.mrb[0].mxu0
    %997 = vmatprep.mubr.bf16.mxu0 0
    %998 = vmatmul.mubr.bf16.gmra.mrb[0].mxu0 %v850
    %v999 = vpop.f32.mrb[0].mxu0
    %v1000 = vadd.f32 %v883, %v999
    %v1001 = vpop.f32.mrb[0].mxu0
    %v1002 = vpop.f32.mrb[0].mxu0
    %v1003 = vadd.f32 %v883, %v1002
    %v1004 = vpop.f32.mrb[0].mxu0
    %1005 = vmatprep.mubr.bf16.mxu0 0
    %1006 = vmatmul.mubr.bf16.gmra.mrb[0].mxu0 %v851
    %v1007 = vpop.f32.mrb[0].mxu0
    %v1008 = vadd.f32 %v883, %v1007
    %v1009 = vpop.f32.mrb[0].mxu0
    %v1010 = vpop.f32.mrb[0].mxu0
    %v1011 = vadd.f32 %v883, %v1010
    %v1012 = vpop.f32.mrb[0].mxu0
    %1013 = vmatprep.mubr.bf16.mxu0 0
    %1014 = vmatmul.mubr.bf16.gmra.mrb[0].mxu0 %v852
    %v1015 = vpop.f32.mrb[0].mxu0
    %v1016 = vadd.f32 %v883, %v1015
    %v1017 = vpop.f32.mrb[0].mxu0
    %v1018 = vpop.f32.mrb[0].mxu0
    %v1019 = vadd.f32 %v883, %v1018
    %v1020 = vpop.f32.mrb[0].mxu0
    %1021 = vmatprep.mubr.bf16.mxu0 0
    %1022 = vmatmul.mubr.bf16.gmra.mrb[0].mxu0 %v853
    %v1023 = vpop.f32.mrb[0].mxu0
    %v1024 = vadd.f32 %v883, %v1023
    %v1025 = vpop.f32.mrb[0].mxu0
    %v1026 = vpop.f32.mrb[0].mxu0
    %v1027 = vadd.f32 %v883, %v1026
    %v1028 = vpop.f32.mrb[0].mxu0
    %1029 = vmatprep.mubr.bf16.mxu0 0
    %1030 = vmatmul.mubr.bf16.gmra.mrb[0].mxu0 %v854
    %v1031 = vpop.f32.mrb[0].mxu0
    %v1032 = vadd.f32 %v883, %v1031
    %v1033 = vpop.f32.mrb[0].mxu0
    %v1034 = vpop.f32.mrb[0].mxu0
    %v1035 = vadd.f32 %v883, %v1034
    %v1036 = vpop.f32.mrb[0].mxu0
    %1037 = vmatprep.mubr.bf16.mxu0 0
    %1038 = vmatmul.mubr.bf16.gmra.mrb[0].mxu0 %v855
    %v1039 = vpop.f32.mrb[0].mxu0
    %v1040 = vadd.f32 %v883, %v1039
    %v1041 = vpop.f32.mrb[0].mxu0
    %v1042 = vpop.f32.mrb[0].mxu0
    %v1043 = vadd.f32 %v883, %v1042
    %v1044 = vpop.f32.mrb[0].mxu0
    %1045 = vmatprep.mubr.bf16.mxu0 0
    %1046 = vmatmul.mubr.bf16.gmra.mrb[0].mxu0 %v856
    %v1047 = vpop.f32.mrb[0].mxu0
    %v1048 = vadd.f32 %v883, %v1047
    %v1049 = vpop.f32.mrb[0].mxu0
    %v1050 = vpop.f32.mrb[0].mxu0
    %v1051 = vadd.f32 %v883, %v1050
    %v1052 = vpop.f32.mrb[0].mxu0
    %1053 = vmatprep.mubr.bf16.mxu0 0
    %1054 = vmatmul.mubr.bf16.gmra.mrb[0].mxu0 %v857
    %v1055 = vpop.f32.mrb[0].mxu0
    %v1056 = vadd.f32 %v883, %v1055
    %v1057 = vpop.f32.mrb[0].mxu0
    %v1058 = vpop.f32.mrb[0].mxu0
    %v1059 = vadd.f32 %v883, %v1058
    %v1060 = vpop.f32.mrb[0].mxu0
    %1061 = vmatprep.mubr.bf16.mxu0 0
    %1062 = vmatmul.mubr.bf16.gmra.mrb[0].mxu0 %v858
    %v1063 = vpop.f32.mrb[0].mxu0
    %v1064 = vadd.f32 %v883, %v1063
    %v1065 = vpop.f32.mrb[0].mxu0
    %v1066 = vpop.f32.mrb[0].mxu0
    %v1067 = vadd.f32 %v883, %v1066
    %v1068 = vpop.f32.mrb[0].mxu0
    %1069 = vmatprep.mubr.bf16.mxu0 0
    %1070 = vmatmul.mubr.bf16.gmra.mrb[0].mxu0 %v859
    %v1071 = vpop.f32.mrb[0].mxu0
    %v1072 = vadd.f32 %v883, %v1071
    %v1073 = vpop.f32.mrb[0].mxu0
    %v1074 = vpop.f32.mrb[0].mxu0
    %v1075 = vadd.f32 %v883, %v1074
    %v1076 = vpop.f32.mrb[0].mxu0
    %1077 = vmatprep.mubr.bf16.mxu0 0
    %1078 = vmatmul.mubr.bf16.gmra.mrb[0].mxu0 %v860
    %v1079 = vpop.f32.mrb[0].mxu0
    %v1080 = vadd.f32 %v883, %v1079
    %v1081 = vpop.f32.mrb[0].mxu0
    %v1082 = vpop.f32.mrb[0].mxu0
    %v1083 = vadd.f32 %v883, %v1082
    %v1084 = vpop.f32.mrb[0].mxu0
    %1085 = vmatprep.mubr.bf16.mxu0 0
    %1086 = vmatmul.mubr.bf16.gmra.mrb[0].mxu0 %v861
    %v1087 = vpop.f32.mrb[0].mxu0
    %v1088 = vadd.f32 %v883, %v1087
    %v1089 = vpop.f32.mrb[0].mxu0
    %v1090 = vpop.f32.mrb[0].mxu0
    %v1091 = vadd.f32 %v883, %v1090
    %v1092 = vpop.f32.mrb[0].mxu0
    %1093 = vdwg.mxu0
    %v1094 = vmax.f32 %v968, 0.0
    %v1095 = vmax.f32 %v971, 0.0
    %v1096 = vmax.f32 %v976, 0.0
    %v1097 = vmax.f32 %v979, 0.0
    %v1098 = vmax.f32 %v984, 0.0
    %v1099 = vmax.f32 %v987, 0.0
    %v1100 = vmax.f32 %v992, 0.0
    %v1101 = vmax.f32 %v995, 0.0
    %v1102 = vmax.f32 %v1000, 0.0
    %v1103 = vmax.f32 %v1003, 0.0
    %v1104 = vmax.f32 %v1008, 0.0
    %v1105 = vmax.f32 %v1011, 0.0
    %v1106 = vmax.f32 %v1016, 0.0
    %v1107 = vmax.f32 %v1019, 0.0
    %v1108 = vmax.f32 %v1024, 0.0
    %v1109 = vmax.f32 %v1027, 0.0
    %v1110 = vmax.f32 %v1032, 0.0
    %v1111 = vmax.f32 %v1035, 0.0
    %v1112 = vmax.f32 %v1040, 0.0
    %v1113 = vmax.f32 %v1043, 0.0
    %v1114 = vmax.f32 %v1048, 0.0
    %v1115 = vmax.f32 %v1051, 0.0
    %v1116 = vmax.f32 %v1056, 0.0
    %v1117 = vmax.f32 %v1059, 0.0
    %v1118 = vmax.f32 %v1064, 0.0
    %v1119 = vmax.f32 %v1067, 0.0
    %v1120 = vmax.f32 %v1072, 0.0
    %v1121 = vmax.f32 %v1075, 0.0
    %v1122 = vmax.f32 %v1080, 0.0
    %v1123 = vmax.f32 %v1083, 0.0
    %v1124 = vmax.f32 %v1088, 0.0
    %v1125 = vmax.f32 %v1091, 0.0
    %v1126 = vpack.c.bf16 %v1095, %v1094
    %v1127 = vpack.c.bf16 %v1097, %v1096
    %v1128 = vpack.c.bf16 %v1099, %v1098
    %v1129 = vpack.c.bf16 %v1101, %v1100
    %v1130 = vpack.c.bf16 %v1103, %v1102
    %v1131 = vpack.c.bf16 %v1105, %v1104
    %v1132 = vpack.c.bf16 %v1107, %v1106
    %v1133 = vpack.c.bf16 %v1109, %v1108
    %v1134 = vpack.c.bf16 %v1111, %v1110
    %v1135 = vpack.c.bf16 %v1113, %v1112
    %v1136 = vpack.c.bf16 %v1115, %v1114
    %v1137 = vpack.c.bf16 %v1117, %v1116
    %v1138 = vpack.c.bf16 %v1119, %v1118
    %v1139 = vpack.c.bf16 %v1121, %v1120
    %v1140 = vpack.c.bf16 %v1123, %v1122
    %v1141 = vpack.c.bf16 %v1125, %v1124
    %v1142 = vld [vmem:[%s7] sm:$0xf]
    %v1143 = vld [vmem:[%s7 + $0x4] sm:$0xf]
    %v1144 = vld [vmem:[%s7 + $0x8] sm:$0xf]
    %v1145 = vld [vmem:[%s7 + $0xc] sm:$0xf]
    %v1146 = vld [vmem:[%s7 + $0x10] sm:$0xf]
    %v1147 = vld [vmem:[%s7 + $0x14] sm:$0xf]
    %v1148 = vld [vmem:[%s7 + $0x18] sm:$0xf]
    %v1149 = vld [vmem:[%s7 + $0x1c] sm:$0xf]
    %v1150 = vld [vmem:[%s7 + $0x20] sm:$0xf]
    %v1151 = vld [vmem:[%s7 + $0x24] sm:$0xf]
    %v1152 = vld [vmem:[%s7 + $0x28] sm:$0xf]
    %v1153 = vld [vmem:[%s7 + $0x2c] sm:$0xf]
    %v1154 = vld [vmem:[%s7 + $0x30] sm:$0xf]
    %v1155 = vld [vmem:[%s7 + $0x34] sm:$0xf]
    %v1156 = vld [vmem:[%s7 + $0x38] sm:$0xf]
    %v1157 = vld [vmem:[%s7 + $0x3c] sm:$0xf]
    %v1158 = vld [vmem:[%s8] sm:$0x1]
    %v1160 = vlaneseq
    %v1161 = vshrl.u32 %v1160, 7
    %v1162 = vsub.s32 0, %v1161
    %v1163 = vrot.slane %v1158, %v1162
    %v1181 = vunpack.c.l.b16 %v1142
    %v1182 = vunpack.c.l.b16 %v1143
    %v1183 = vunpack.c.l.b16 %v1144
    %v1184 = vunpack.c.l.b16 %v1145
    %v1185 = vunpack.c.l.b16 %v1146
    %v1186 = vunpack.c.l.b16 %v1147
    %v1187 = vunpack.c.l.b16 %v1148
    %v1188 = vunpack.c.l.b16 %v1149
    %v1189 = vunpack.c.l.b16 %v1150
    %v1190 = vunpack.c.l.b16 %v1151
    %v1191 = vunpack.c.l.b16 %v1152
    %v1192 = vunpack.c.l.b16 %v1153
    %v1193 = vunpack.c.l.b16 %v1154
    %v1194 = vunpack.c.l.b16 %v1155
    %v1195 = vunpack.c.l.b16 %v1156
    %v1196 = vunpack.c.l.b16 %v1157
    %v1197 = vpack.c.b16 %v1182, %v1181
    %v1198 = vpack.c.b16 %v1184, %v1183
    %v1199 = vpack.c.b16 %v1186, %v1185
    %v1200 = vpack.c.b16 %v1188, %v1187
    %v1201 = vpack.c.b16 %v1190, %v1189
    %v1202 = vpack.c.b16 %v1192, %v1191
    %v1203 = vpack.c.b16 %v1194, %v1193
    %v1204 = vpack.c.b16 %v1196, %v1195
    %1213 = vmatprep.subr.bf16.mxu0 0
    %1214 = vmatpush1.bf16.msra.mxu0 %v1197
    %1215 = vmatprep.subr.bf16.mxu0 0
    %1216 = vmatpush1.bf16.msra.mxu0 %v1198
    %1217 = vmatprep.subr.bf16.mxu0 0
    %1218 = vmatpush1.bf16.msra.mxu0 %v1199
    %1219 = vmatprep.subr.bf16.mxu0 0
    %1220 = vmatpush1.bf16.msra.mxu0 %v1200
    %1221 = vmatprep.subr.bf16.mxu0 0
    %1222 = vmatpush1.bf16.msra.mxu0 %v1201
    %1223 = vmatprep.subr.bf16.mxu0 0
    %1224 = vmatpush1.bf16.msra.mxu0 %v1202
    %1225 = vmatprep.subr.bf16.mxu0 0
    %1226 = vmatpush1.bf16.msra.mxu0 %v1203
    %1227 = vmatprep.subr.bf16.mxu0 0
    %1228 = vmatpush1.bf16.msra.mxu0 %v1204
    %1229 = vmatprep.subr.bf16.mxu0 0
    %1230 = vmatpush1.bf16.msra.mxu0 0
    %1231 = vmatprep.subr.bf16.mxu0 0
    %1232 = vmatpush1.bf16.msra.mxu0 0
    %1233 = vmatprep.subr.bf16.mxu0 0
    %1234 = vmatpush1.bf16.msra.mxu0 0
    %1235 = vmatprep.subr.bf16.mxu0 0
    %1236 = vmatpush1.bf16.msra.mxu0 0
    %1237 = vmatprep.subr.bf16.mxu0 0
    %1238 = vmatpush1.bf16.msra.mxu0 0
    %1239 = vmatprep.subr.bf16.mxu0 0
    %1240 = vmatpush1.bf16.msra.mxu0 0
    %1241 = vmatprep.subr.bf16.mxu0 0
    %1242 = vmatpush1.bf16.msra.mxu0 0
    %1243 = vmatprep.subr.bf16.mxu0 0
    %1244 = vmatpush1.bf16.msra.mxu0 0
    %1245 = vmatprep.mubr.bf16.mxu0 0
    %1246 = vmatmul.mubr.bf16.gmra.mrb[0].mxu0 %v1126
    %v1247 = vpop.f32.mrb[0].mxu0
    %v1248 = vadd.f32 %v1163, %v1247
    %v1249 = vpop.f32.mrb[0].mxu0
    %v1250 = vpop.f32.mrb[0].mxu0
    %v1251 = vadd.f32 %v1163, %v1250
    %v1252 = vpop.f32.mrb[0].mxu0
    %1253 = vmatprep.mubr.bf16.mxu0 0
    %1254 = vmatmul.mubr.bf16.gmra.mrb[0].mxu0 %v1127
    %v1255 = vpop.f32.mrb[0].mxu0
    %v1256 = vadd.f32 %v1163, %v1255
    %v1257 = vpop.f32.mrb[0].mxu0
    %v1258 = vpop.f32.mrb[0].mxu0
    %v1259 = vadd.f32 %v1163, %v1258
    %v1260 = vpop.f32.mrb[0].mxu0
    %1261 = vmatprep.mubr.bf16.mxu0 0
    %1262 = vmatmul.mubr.bf16.gmra.mrb[0].mxu0 %v1128
    %v1263 = vpop.f32.mrb[0].mxu0
    %v1264 = vadd.f32 %v1163, %v1263
    %v1265 = vpop.f32.mrb[0].mxu0
    %v1266 = vpop.f32.mrb[0].mxu0
    %v1267 = vadd.f32 %v1163, %v1266
    %v1268 = vpop.f32.mrb[0].mxu0
    %1269 = vmatprep.mubr.bf16.mxu0 0
    %1270 = vmatmul.mubr.bf16.gmra.mrb[0].mxu0 %v1129
    %v1271 = vpop.f32.mrb[0].mxu0
    %v1272 = vadd.f32 %v1163, %v1271
    %v1273 = vpop.f32.mrb[0].mxu0
    %v1274 = vpop.f32.mrb[0].mxu0
    %v1275 = vadd.f32 %v1163, %v1274
    %v1276 = vpop.f32.mrb[0].mxu0
    %1277 = vmatprep.mubr.bf16.mxu0 0
    %1278 = vmatmul.mubr.bf16.gmra.mrb[0].mxu0 %v1130
    %v1279 = vpop.f32.mrb[0].mxu0
    %v1280 = vadd.f32 %v1163, %v1279
    %v1281 = vpop.f32.mrb[0].mxu0
    %v1282 = vpop.f32.mrb[0].mxu0
    %v1283 = vadd.f32 %v1163, %v1282
    %v1284 = vpop.f32.mrb[0].mxu0
    %1285 = vmatprep.mubr.bf16.mxu0 0
    %1286 = vmatmul.mubr.bf16.gmra.mrb[0].mxu0 %v1131
    %v1287 = vpop.f32.mrb[0].mxu0
    %v1288 = vadd.f32 %v1163, %v1287
    %v1289 = vpop.f32.mrb[0].mxu0
    %v1290 = vpop.f32.mrb[0].mxu0
    %v1291 = vadd.f32 %v1163, %v1290
    %v1292 = vpop.f32.mrb[0].mxu0
    %1293 = vmatprep.mubr.bf16.mxu0 0
    %1294 = vmatmul.mubr.bf16.gmra.mrb[0].mxu0 %v1132
    %v1295 = vpop.f32.mrb[0].mxu0
    %v1296 = vadd.f32 %v1163, %v1295
    %v1297 = vpop.f32.mrb[0].mxu0
    %v1298 = vpop.f32.mrb[0].mxu0
    %v1299 = vadd.f32 %v1163, %v1298
    %v1300 = vpop.f32.mrb[0].mxu0
    %1301 = vmatprep.mubr.bf16.mxu0 0
    %1302 = vmatmul.mubr.bf16.gmra.mrb[0].mxu0 %v1133
    %v1303 = vpop.f32.mrb[0].mxu0
    %v1304 = vadd.f32 %v1163, %v1303
    %v1305 = vpop.f32.mrb[0].mxu0
    %v1306 = vpop.f32.mrb[0].mxu0
    %v1307 = vadd.f32 %v1163, %v1306
    %v1308 = vpop.f32.mrb[0].mxu0
    %1309 = vmatprep.mubr.bf16.mxu0 0
    %1310 = vmatmul.mubr.bf16.gmra.mrb[0].mxu0 %v1134
    %v1311 = vpop.f32.mrb[0].mxu0
    %v1312 = vadd.f32 %v1163, %v1311
    %v1313 = vpop.f32.mrb[0].mxu0
    %v1314 = vpop.f32.mrb[0].mxu0
    %v1315 = vadd.f32 %v1163, %v1314
    %v1316 = vpop.f32.mrb[0].mxu0
    %1317 = vmatprep.mubr.bf16.mxu0 0
    %1318 = vmatmul.mubr.bf16.gmra.mrb[0].mxu0 %v1135
    %v1319 = vpop.f32.mrb[0].mxu0
    %v1320 = vadd.f32 %v1163, %v1319
    %v1321 = vpop.f32.mrb[0].mxu0
    %v1322 = vpop.f32.mrb[0].mxu0
    %v1323 = vadd.f32 %v1163, %v1322
    %v1324 = vpop.f32.mrb[0].mxu0
    %1325 = vmatprep.mubr.bf16.mxu0 0
    %1326 = vmatmul.mubr.bf16.gmra.mrb[0].mxu0 %v1136
    %v1327 = vpop.f32.mrb[0].mxu0
    %v1328 = vadd.f32 %v1163, %v1327
    %v1329 = vpop.f32.mrb[0].mxu0
    %v1330 = vpop.f32.mrb[0].mxu0
    %v1331 = vadd.f32 %v1163, %v1330
    %v1332 = vpop.f32.mrb[0].mxu0
    %1333 = vmatprep.mubr.bf16.mxu0 0
    %1334 = vmatmul.mubr.bf16.gmra.mrb[0].mxu0 %v1137
    %v1335 = vpop.f32.mrb[0].mxu0
    %v1336 = vadd.f32 %v1163, %v1335
    %v1337 = vpop.f32.mrb[0].mxu0
    %v1338 = vpop.f32.mrb[0].mxu0
    %v1339 = vadd.f32 %v1163, %v1338
    %v1340 = vpop.f32.mrb[0].mxu0
    %1341 = vmatprep.mubr.bf16.mxu0 0
    %1342 = vmatmul.mubr.bf16.gmra.mrb[0].mxu0 %v1138
    %v1343 = vpop.f32.mrb[0].mxu0
    %v1344 = vadd.f32 %v1163, %v1343
    %v1345 = vpop.f32.mrb[0].mxu0
    %v1346 = vpop.f32.mrb[0].mxu0
    %v1347 = vadd.f32 %v1163, %v1346
    %v1348 = vpop.f32.mrb[0].mxu0
    %1349 = vmatprep.mubr.bf16.mxu0 0
    %1350 = vmatmul.mubr.bf16.gmra.mrb[0].mxu0 %v1139
    %v1351 = vpop.f32.mrb[0].mxu0
    %v1352 = vadd.f32 %v1163, %v1351
    %v1353 = vpop.f32.mrb[0].mxu0
    %v1354 = vpop.f32.mrb[0].mxu0
    %v1355 = vadd.f32 %v1163, %v1354
    %v1356 = vpop.f32.mrb[0].mxu0
    %1357 = vmatprep.mubr.bf16.mxu0 0
    %1358 = vmatmul.mubr.bf16.gmra.mrb[0].mxu0 %v1140
    %v1359 = vpop.f32.mrb[0].mxu0
    %v1360 = vadd.f32 %v1163, %v1359
    %v1361 = vpop.f32.mrb[0].mxu0
    %v1362 = vpop.f32.mrb[0].mxu0
    %v1363 = vadd.f32 %v1163, %v1362
    %v1364 = vpop.f32.mrb[0].mxu0
    %1365 = vmatprep.mubr.bf16.mxu0 0
    %1366 = vmatmul.mubr.bf16.gmra.mrb[0].mxu0 %v1141
    %v1367 = vpop.f32.mrb[0].mxu0
    %v1368 = vadd.f32 %v1163, %v1367
    %v1369 = vpop.f32.mrb[0].mxu0
    %v1370 = vpop.f32.mrb[0].mxu0
    %v1371 = vadd.f32 %v1163, %v1370
    %v1372 = vpop.f32.mrb[0].mxu0
    %1373 = vdwg.mxu0
    %v1374 = vmax.f32 %v1248, 0.0
    %v1375 = vmax.f32 %v1251, 0.0
    %v1376 = vmax.f32 %v1256, 0.0
    %v1377 = vmax.f32 %v1259, 0.0
    %v1378 = vmax.f32 %v1264, 0.0
    %v1379 = vmax.f32 %v1267, 0.0
    %v1380 = vmax.f32 %v1272, 0.0
    %v1381 = vmax.f32 %v1275, 0.0
    %v1382 = vmax.f32 %v1280, 0.0
    %v1383 = vmax.f32 %v1283, 0.0
    %v1384 = vmax.f32 %v1288, 0.0
    %v1385 = vmax.f32 %v1291, 0.0
    %v1386 = vmax.f32 %v1296, 0.0
    %v1387 = vmax.f32 %v1299, 0.0
    %v1388 = vmax.f32 %v1304, 0.0
    %v1389 = vmax.f32 %v1307, 0.0
    %v1390 = vmax.f32 %v1312, 0.0
    %v1391 = vmax.f32 %v1315, 0.0
    %v1392 = vmax.f32 %v1320, 0.0
    %v1393 = vmax.f32 %v1323, 0.0
    %v1394 = vmax.f32 %v1328, 0.0
    %v1395 = vmax.f32 %v1331, 0.0
    %v1396 = vmax.f32 %v1336, 0.0
    %v1397 = vmax.f32 %v1339, 0.0
    %v1398 = vmax.f32 %v1344, 0.0
    %v1399 = vmax.f32 %v1347, 0.0
    %v1400 = vmax.f32 %v1352, 0.0
    %v1401 = vmax.f32 %v1355, 0.0
    %v1402 = vmax.f32 %v1360, 0.0
    %v1403 = vmax.f32 %v1363, 0.0
    %v1404 = vmax.f32 %v1368, 0.0
    %v1405 = vmax.f32 %v1371, 0.0
    %v1406 = vpack.c.bf16 %v1375, %v1374
    %v1407 = vpack.c.bf16 %v1377, %v1376
    %v1408 = vpack.c.bf16 %v1379, %v1378
    %v1409 = vpack.c.bf16 %v1381, %v1380
    %v1410 = vpack.c.bf16 %v1383, %v1382
    %v1411 = vpack.c.bf16 %v1385, %v1384
    %v1412 = vpack.c.bf16 %v1387, %v1386
    %v1413 = vpack.c.bf16 %v1389, %v1388
    %v1414 = vpack.c.bf16 %v1391, %v1390
    %v1415 = vpack.c.bf16 %v1393, %v1392
    %v1416 = vpack.c.bf16 %v1395, %v1394
    %v1417 = vpack.c.bf16 %v1397, %v1396
    %v1418 = vpack.c.bf16 %v1399, %v1398
    %v1419 = vpack.c.bf16 %v1401, %v1400
    %v1420 = vpack.c.bf16 %v1403, %v1402
    %v1421 = vpack.c.bf16 %v1405, %v1404
    %v1422 = vld [vmem:[%s9] sm:$0xf]
    %v1423 = vld [vmem:[%s9 + $0x4] sm:$0xf]
    %v1424 = vld [vmem:[%s9 + $0x8] sm:$0xf]
    %v1425 = vld [vmem:[%s9 + $0xc] sm:$0xf]
    %v1426 = vld [vmem:[%s9 + $0x10] sm:$0xf]
    %v1427 = vld [vmem:[%s9 + $0x14] sm:$0xf]
    %v1428 = vld [vmem:[%s9 + $0x18] sm:$0xf]
    %v1429 = vld [vmem:[%s9 + $0x1c] sm:$0xf]
    %v1430 = vld [vmem:[%s9 + $0x20] sm:$0xf]
    %v1431 = vld [vmem:[%s9 + $0x24] sm:$0xf]
    %v1432 = vld [vmem:[%s9 + $0x28] sm:$0xf]
    %v1433 = vld [vmem:[%s9 + $0x2c] sm:$0xf]
    %v1434 = vld [vmem:[%s9 + $0x30] sm:$0xf]
    %v1435 = vld [vmem:[%s9 + $0x34] sm:$0xf]
    %v1436 = vld [vmem:[%s9 + $0x38] sm:$0xf]
    %v1437 = vld [vmem:[%s9 + $0x3c] sm:$0xf]
    %v1438 = vld [vmem:[%s10] sm:$0x1]
    %v1440 = vlaneseq
    %v1441 = vshrl.u32 %v1440, 7
    %v1442 = vsub.s32 0, %v1441
    %v1443 = vrot.slane %v1438, %v1442
    %v1461 = vunpack.c.l.b16 %v1422
    %v1462 = vunpack.c.l.b16 %v1423
    %v1463 = vunpack.c.l.b16 %v1424
    %v1464 = vunpack.c.l.b16 %v1425
    %v1465 = vunpack.c.l.b16 %v1426
    %v1466 = vunpack.c.l.b16 %v1427
    %v1467 = vunpack.c.l.b16 %v1428
    %v1468 = vunpack.c.l.b16 %v1429
    %v1469 = vunpack.c.l.b16 %v1430
    %v1470 = vunpack.c.l.b16 %v1431
    %v1471 = vunpack.c.l.b16 %v1432
    %v1472 = vunpack.c.l.b16 %v1433
    %v1473 = vunpack.c.l.b16 %v1434
    %v1474 = vunpack.c.l.b16 %v1435
    %v1475 = vunpack.c.l.b16 %v1436
    %v1476 = vunpack.c.l.b16 %v1437
    %v1477 = vpack.c.b16 %v1462, %v1461
    %v1478 = vpack.c.b16 %v1464, %v1463
    %v1479 = vpack.c.b16 %v1466, %v1465
    %v1480 = vpack.c.b16 %v1468, %v1467
    %v1481 = vpack.c.b16 %v1470, %v1469
    %v1482 = vpack.c.b16 %v1472, %v1471
    %v1483 = vpack.c.b16 %v1474, %v1473
    %v1484 = vpack.c.b16 %v1476, %v1475
    %1493 = vmatprep.subr.bf16.mxu0 0
    %1494 = vmatpush1.bf16.msra.mxu0 %v1477
    %1495 = vmatprep.subr.bf16.mxu0 0
    %1496 = vmatpush1.bf16.msra.mxu0 %v1478
    %1497 = vmatprep.subr.bf16.mxu0 0
    %1498 = vmatpush1.bf16.msra.mxu0 %v1479
    %1499 = vmatprep.subr.bf16.mxu0 0
    %1500 = vmatpush1.bf16.msra.mxu0 %v1480
    %1501 = vmatprep.subr.bf16.mxu0 0
    %1502 = vmatpush1.bf16.msra.mxu0 %v1481
    %1503 = vmatprep.subr.bf16.mxu0 0
    %1504 = vmatpush1.bf16.msra.mxu0 %v1482
    %1505 = vmatprep.subr.bf16.mxu0 0
    %1506 = vmatpush1.bf16.msra.mxu0 %v1483
    %1507 = vmatprep.subr.bf16.mxu0 0
    %1508 = vmatpush1.bf16.msra.mxu0 %v1484
    %1509 = vmatprep.subr.bf16.mxu0 0
    %1510 = vmatpush1.bf16.msra.mxu0 0
    %1511 = vmatprep.subr.bf16.mxu0 0
    %1512 = vmatpush1.bf16.msra.mxu0 0
    %1513 = vmatprep.subr.bf16.mxu0 0
    %1514 = vmatpush1.bf16.msra.mxu0 0
    %1515 = vmatprep.subr.bf16.mxu0 0
    %1516 = vmatpush1.bf16.msra.mxu0 0
    %1517 = vmatprep.subr.bf16.mxu0 0
    %1518 = vmatpush1.bf16.msra.mxu0 0
    %1519 = vmatprep.subr.bf16.mxu0 0
    %1520 = vmatpush1.bf16.msra.mxu0 0
    %1521 = vmatprep.subr.bf16.mxu0 0
    %1522 = vmatpush1.bf16.msra.mxu0 0
    %1523 = vmatprep.subr.bf16.mxu0 0
    %1524 = vmatpush1.bf16.msra.mxu0 0
    %1525 = vmatprep.mubr.bf16.mxu0 0
    %1526 = vmatmul.mubr.bf16.gmra.mrb[0].mxu0 %v1406
    %v1527 = vpop.f32.mrb[0].mxu0
    %v1528 = vadd.f32 %v1443, %v1527
    %v1529 = vpop.f32.mrb[0].mxu0
    %v1530 = vpop.f32.mrb[0].mxu0
    %v1531 = vadd.f32 %v1443, %v1530
    %v1532 = vpop.f32.mrb[0].mxu0
    %1533 = vmatprep.mubr.bf16.mxu0 0
    %1534 = vmatmul.mubr.bf16.gmra.mrb[0].mxu0 %v1407
    %v1535 = vpop.f32.mrb[0].mxu0
    %v1536 = vadd.f32 %v1443, %v1535
    %v1537 = vpop.f32.mrb[0].mxu0
    %v1538 = vpop.f32.mrb[0].mxu0
    %v1539 = vadd.f32 %v1443, %v1538
    %v1540 = vpop.f32.mrb[0].mxu0
    %1541 = vmatprep.mubr.bf16.mxu0 0
    %1542 = vmatmul.mubr.bf16.gmra.mrb[0].mxu0 %v1408
    %v1543 = vpop.f32.mrb[0].mxu0
    %v1544 = vadd.f32 %v1443, %v1543
    %v1545 = vpop.f32.mrb[0].mxu0
    %v1546 = vpop.f32.mrb[0].mxu0
    %v1547 = vadd.f32 %v1443, %v1546
    %v1548 = vpop.f32.mrb[0].mxu0
    %1549 = vmatprep.mubr.bf16.mxu0 0
    %1550 = vmatmul.mubr.bf16.gmra.mrb[0].mxu0 %v1409
    %v1551 = vpop.f32.mrb[0].mxu0
    %v1552 = vadd.f32 %v1443, %v1551
    %v1553 = vpop.f32.mrb[0].mxu0
    %v1554 = vpop.f32.mrb[0].mxu0
    %v1555 = vadd.f32 %v1443, %v1554
    %v1556 = vpop.f32.mrb[0].mxu0
    %1557 = vmatprep.mubr.bf16.mxu0 0
    %1558 = vmatmul.mubr.bf16.gmra.mrb[0].mxu0 %v1410
    %v1559 = vpop.f32.mrb[0].mxu0
    %v1560 = vadd.f32 %v1443, %v1559
    %v1561 = vpop.f32.mrb[0].mxu0
    %v1562 = vpop.f32.mrb[0].mxu0
    %v1563 = vadd.f32 %v1443, %v1562
    %v1564 = vpop.f32.mrb[0].mxu0
    %1565 = vmatprep.mubr.bf16.mxu0 0
    %1566 = vmatmul.mubr.bf16.gmra.mrb[0].mxu0 %v1411
    %v1567 = vpop.f32.mrb[0].mxu0
    %v1568 = vadd.f32 %v1443, %v1567
    %v1569 = vpop.f32.mrb[0].mxu0
    %v1570 = vpop.f32.mrb[0].mxu0
    %v1571 = vadd.f32 %v1443, %v1570
    %v1572 = vpop.f32.mrb[0].mxu0
    %1573 = vmatprep.mubr.bf16.mxu0 0
    %1574 = vmatmul.mubr.bf16.gmra.mrb[0].mxu0 %v1412
    %v1575 = vpop.f32.mrb[0].mxu0
    %v1576 = vadd.f32 %v1443, %v1575
    %v1577 = vpop.f32.mrb[0].mxu0
    %v1578 = vpop.f32.mrb[0].mxu0
    %v1579 = vadd.f32 %v1443, %v1578
    %v1580 = vpop.f32.mrb[0].mxu0
    %1581 = vmatprep.mubr.bf16.mxu0 0
    %1582 = vmatmul.mubr.bf16.gmra.mrb[0].mxu0 %v1413
    %v1583 = vpop.f32.mrb[0].mxu0
    %v1584 = vadd.f32 %v1443, %v1583
    %v1585 = vpop.f32.mrb[0].mxu0
    %v1586 = vpop.f32.mrb[0].mxu0
    %v1587 = vadd.f32 %v1443, %v1586
    %v1588 = vpop.f32.mrb[0].mxu0
    %1589 = vmatprep.mubr.bf16.mxu0 0
    %1590 = vmatmul.mubr.bf16.gmra.mrb[0].mxu0 %v1414
    %v1591 = vpop.f32.mrb[0].mxu0
    %v1592 = vadd.f32 %v1443, %v1591
    %v1593 = vpop.f32.mrb[0].mxu0
    %v1594 = vpop.f32.mrb[0].mxu0
    %v1595 = vadd.f32 %v1443, %v1594
    %v1596 = vpop.f32.mrb[0].mxu0
    %1597 = vmatprep.mubr.bf16.mxu0 0
    %1598 = vmatmul.mubr.bf16.gmra.mrb[0].mxu0 %v1415
    %v1599 = vpop.f32.mrb[0].mxu0
    %v1600 = vadd.f32 %v1443, %v1599
    %v1601 = vpop.f32.mrb[0].mxu0
    %v1602 = vpop.f32.mrb[0].mxu0
    %v1603 = vadd.f32 %v1443, %v1602
    %v1604 = vpop.f32.mrb[0].mxu0
    %1605 = vmatprep.mubr.bf16.mxu0 0
    %1606 = vmatmul.mubr.bf16.gmra.mrb[0].mxu0 %v1416
    %v1607 = vpop.f32.mrb[0].mxu0
    %v1608 = vadd.f32 %v1443, %v1607
    %v1609 = vpop.f32.mrb[0].mxu0
    %v1610 = vpop.f32.mrb[0].mxu0
    %v1611 = vadd.f32 %v1443, %v1610
    %v1612 = vpop.f32.mrb[0].mxu0
    %1613 = vmatprep.mubr.bf16.mxu0 0
    %1614 = vmatmul.mubr.bf16.gmra.mrb[0].mxu0 %v1417
    %v1615 = vpop.f32.mrb[0].mxu0
    %v1616 = vadd.f32 %v1443, %v1615
    %v1617 = vpop.f32.mrb[0].mxu0
    %v1618 = vpop.f32.mrb[0].mxu0
    %v1619 = vadd.f32 %v1443, %v1618
    %v1620 = vpop.f32.mrb[0].mxu0
    %1621 = vmatprep.mubr.bf16.mxu0 0
    %1622 = vmatmul.mubr.bf16.gmra.mrb[0].mxu0 %v1418
    %v1623 = vpop.f32.mrb[0].mxu0
    %v1624 = vadd.f32 %v1443, %v1623
    %v1625 = vpop.f32.mrb[0].mxu0
    %v1626 = vpop.f32.mrb[0].mxu0
    %v1627 = vadd.f32 %v1443, %v1626
    %v1628 = vpop.f32.mrb[0].mxu0
    %1629 = vmatprep.mubr.bf16.mxu0 0
    %1630 = vmatmul.mubr.bf16.gmra.mrb[0].mxu0 %v1419
    %v1631 = vpop.f32.mrb[0].mxu0
    %v1632 = vadd.f32 %v1443, %v1631
    %v1633 = vpop.f32.mrb[0].mxu0
    %v1634 = vpop.f32.mrb[0].mxu0
    %v1635 = vadd.f32 %v1443, %v1634
    %v1636 = vpop.f32.mrb[0].mxu0
    %1637 = vmatprep.mubr.bf16.mxu0 0
    %1638 = vmatmul.mubr.bf16.gmra.mrb[0].mxu0 %v1420
    %v1639 = vpop.f32.mrb[0].mxu0
    %v1640 = vadd.f32 %v1443, %v1639
    %v1641 = vpop.f32.mrb[0].mxu0
    %v1642 = vpop.f32.mrb[0].mxu0
    %v1643 = vadd.f32 %v1443, %v1642
    %v1644 = vpop.f32.mrb[0].mxu0
    %1645 = vmatprep.mubr.bf16.mxu0 0
    %1646 = vmatmul.mubr.bf16.gmra.mrb[0].mxu0 %v1421
    %v1647 = vpop.f32.mrb[0].mxu0
    %v1648 = vadd.f32 %v1443, %v1647
    %v1649 = vpop.f32.mrb[0].mxu0
    %v1650 = vpop.f32.mrb[0].mxu0
    %v1651 = vadd.f32 %v1443, %v1650
    %v1652 = vpop.f32.mrb[0].mxu0
    %1653 = vdwg.mxu0
    %v1654 = vmax.f32 %v1528, 0.0
    %v1655 = vmax.f32 %v1531, 0.0
    %v1656 = vmax.f32 %v1536, 0.0
    %v1657 = vmax.f32 %v1539, 0.0
    %v1658 = vmax.f32 %v1544, 0.0
    %v1659 = vmax.f32 %v1547, 0.0
    %v1660 = vmax.f32 %v1552, 0.0
    %v1661 = vmax.f32 %v1555, 0.0
    %v1662 = vmax.f32 %v1560, 0.0
    %v1663 = vmax.f32 %v1563, 0.0
    %v1664 = vmax.f32 %v1568, 0.0
    %v1665 = vmax.f32 %v1571, 0.0
    %v1666 = vmax.f32 %v1576, 0.0
    %v1667 = vmax.f32 %v1579, 0.0
    %v1668 = vmax.f32 %v1584, 0.0
    %v1669 = vmax.f32 %v1587, 0.0
    %v1670 = vmax.f32 %v1592, 0.0
    %v1671 = vmax.f32 %v1595, 0.0
    %v1672 = vmax.f32 %v1600, 0.0
    %v1673 = vmax.f32 %v1603, 0.0
    %v1674 = vmax.f32 %v1608, 0.0
    %v1675 = vmax.f32 %v1611, 0.0
    %v1676 = vmax.f32 %v1616, 0.0
    %v1677 = vmax.f32 %v1619, 0.0
    %v1678 = vmax.f32 %v1624, 0.0
    %v1679 = vmax.f32 %v1627, 0.0
    %v1680 = vmax.f32 %v1632, 0.0
    %v1681 = vmax.f32 %v1635, 0.0
    %v1682 = vmax.f32 %v1640, 0.0
    %v1683 = vmax.f32 %v1643, 0.0
    %v1684 = vmax.f32 %v1648, 0.0
    %v1685 = vmax.f32 %v1651, 0.0
    %v1686 = vpack.c.bf16 %v1655, %v1654
    %v1687 = vpack.c.bf16 %v1657, %v1656
    %v1688 = vpack.c.bf16 %v1659, %v1658
    %v1689 = vpack.c.bf16 %v1661, %v1660
    %v1690 = vpack.c.bf16 %v1663, %v1662
    %v1691 = vpack.c.bf16 %v1665, %v1664
    %v1692 = vpack.c.bf16 %v1667, %v1666
    %v1693 = vpack.c.bf16 %v1669, %v1668
    %v1694 = vpack.c.bf16 %v1671, %v1670
    %v1695 = vpack.c.bf16 %v1673, %v1672
    %v1696 = vpack.c.bf16 %v1675, %v1674
    %v1697 = vpack.c.bf16 %v1677, %v1676
    %v1698 = vpack.c.bf16 %v1679, %v1678
    %v1699 = vpack.c.bf16 %v1681, %v1680
    %v1700 = vpack.c.bf16 %v1683, %v1682
    %v1701 = vpack.c.bf16 %v1685, %v1684
    %v1702 = vld [vmem:[%s11] sm:$0xff]
    %v1703 = vld [vmem:[%s11 + $0x8] sm:$0xff]
    %v1704 = vld [vmem:[%s11 + $0x10] sm:$0xff]
    %v1705 = vld [vmem:[%s11 + $0x18] sm:$0xff]
    %v1706 = vld [vmem:[%s11 + $0x20] sm:$0xff]
    %v1707 = vld [vmem:[%s11 + $0x28] sm:$0xff]
    %v1708 = vld [vmem:[%s11 + $0x30] sm:$0xff]
    %v1709 = vld [vmem:[%s11 + $0x38] sm:$0xff]
    %v1710 = vld [vmem:[%s11 + $0x40] sm:$0xff]
    %v1711 = vld [vmem:[%s11 + $0x48] sm:$0xff]
    %v1712 = vld [vmem:[%s11 + $0x50] sm:$0xff]
    %v1713 = vld [vmem:[%s11 + $0x58] sm:$0xff]
    %v1714 = vld [vmem:[%s11 + $0x60] sm:$0xff]
    %v1715 = vld [vmem:[%s11 + $0x68] sm:$0xff]
    %v1716 = vld [vmem:[%s11 + $0x70] sm:$0xff]
    %v1717 = vld [vmem:[%s11 + $0x78] sm:$0xff]
    %v1718 = vld [vmem:[%s12] sm:$0x3]
    %v1720 = vlaneseq
    %v1721 = vshrl.u32 %v1720, 7
    %v1722 = vsub.s32 0, %v1721
    %v1723 = vrot.slane %v1718, %v1722
    %v1724 = vlaneseq
    %v1725 = vshrl.u32 %v1724, 7
    %v1726 = vsub.s32 1, %v1725
    %v1727 = vrot.slane %v1718, %v1726
    %v1746 = vunpack.c.l.b16 %v1702
    %v1747 = vunpack.c.h.b16 %v1702
    %v1748 = vunpack.c.l.b16 %v1703
    %v1749 = vunpack.c.h.b16 %v1703
    %v1750 = vunpack.c.l.b16 %v1704
    %v1751 = vunpack.c.h.b16 %v1704
    %v1752 = vunpack.c.l.b16 %v1705
    %v1753 = vunpack.c.h.b16 %v1705
    %v1754 = vunpack.c.l.b16 %v1706
    %v1755 = vunpack.c.h.b16 %v1706
    %v1756 = vunpack.c.l.b16 %v1707
    %v1757 = vunpack.c.h.b16 %v1707
    %v1758 = vunpack.c.l.b16 %v1708
    %v1759 = vunpack.c.h.b16 %v1708
    %v1760 = vunpack.c.l.b16 %v1709
    %v1761 = vunpack.c.h.b16 %v1709
    %v1762 = vunpack.c.l.b16 %v1710
    %v1763 = vunpack.c.h.b16 %v1710
    %v1764 = vunpack.c.l.b16 %v1711
    %v1765 = vunpack.c.h.b16 %v1711
    %v1766 = vunpack.c.l.b16 %v1712
    %v1767 = vunpack.c.h.b16 %v1712
    %v1768 = vunpack.c.l.b16 %v1713
    %v1769 = vunpack.c.h.b16 %v1713
    %v1770 = vunpack.c.l.b16 %v1714
    %v1771 = vunpack.c.h.b16 %v1714
    %v1772 = vunpack.c.l.b16 %v1715
    %v1773 = vunpack.c.h.b16 %v1715
    %v1774 = vunpack.c.l.b16 %v1716
    %v1775 = vunpack.c.h.b16 %v1716
    %v1776 = vunpack.c.l.b16 %v1717
    %v1777 = vunpack.c.h.b16 %v1717
    %v1778 = vpack.c.b16 %v1748, %v1746
    %v1779 = vpack.c.b16 %v1749, %v1747
    %v1780 = vpack.c.b16 %v1752, %v1750
    %v1781 = vpack.c.b16 %v1753, %v1751
    %v1782 = vpack.c.b16 %v1756, %v1754
    %v1783 = vpack.c.b16 %v1757, %v1755
    %v1784 = vpack.c.b16 %v1760, %v1758
    %v1785 = vpack.c.b16 %v1761, %v1759
    %v1786 = vpack.c.b16 %v1764, %v1762
    %v1787 = vpack.c.b16 %v1765, %v1763
    %v1788 = vpack.c.b16 %v1768, %v1766
    %v1789 = vpack.c.b16 %v1769, %v1767
    %v1790 = vpack.c.b16 %v1772, %v1770
    %v1791 = vpack.c.b16 %v1773, %v1771
    %v1792 = vpack.c.b16 %v1776, %v1774
    %v1793 = vpack.c.b16 %v1777, %v1775
    %1810 = vmatprep.subr.bf16.mxu0 %v1779
    %1811 = vmatpush1.bf16.msra.mxu0 %v1778
    %1812 = vmatprep.subr.bf16.mxu0 %v1781
    %1813 = vmatpush1.bf16.msra.mxu0 %v1780
    %1814 = vmatprep.subr.bf16.mxu0 %v1783
    %1815 = vmatpush1.bf16.msra.mxu0 %v1782
    %1816 = vmatprep.subr.bf16.mxu0 %v1785
    %1817 = vmatpush1.bf16.msra.mxu0 %v1784
    %1818 = vmatprep.subr.bf16.mxu0 %v1787
    %1819 = vmatpush1.bf16.msra.mxu0 %v1786
    %1820 = vmatprep.subr.bf16.mxu0 %v1789
    %1821 = vmatpush1.bf16.msra.mxu0 %v1788
    %1822 = vmatprep.subr.bf16.mxu0 %v1791
    %1823 = vmatpush1.bf16.msra.mxu0 %v1790
    %1824 = vmatprep.subr.bf16.mxu0 %v1793
    %1825 = vmatpush1.bf16.msra.mxu0 %v1792
    %1826 = vmatprep.subr.bf16.mxu0 0
    %1827 = vmatpush1.bf16.msra.mxu0 0
    %1828 = vmatprep.subr.bf16.mxu0 0
    %1829 = vmatpush1.bf16.msra.mxu0 0
    %1830 = vmatprep.subr.bf16.mxu0 0
    %1831 = vmatpush1.bf16.msra.mxu0 0
    %1832 = vmatprep.subr.bf16.mxu0 0
    %1833 = vmatpush1.bf16.msra.mxu0 0
    %1834 = vmatprep.subr.bf16.mxu0 0
    %1835 = vmatpush1.bf16.msra.mxu0 0
    %1836 = vmatprep.subr.bf16.mxu0 0
    %1837 = vmatpush1.bf16.msra.mxu0 0
    %1838 = vmatprep.subr.bf16.mxu0 0
    %1839 = vmatpush1.bf16.msra.mxu0 0
    %1840 = vmatprep.subr.bf16.mxu0 0
    %1841 = vmatpush1.bf16.msra.mxu0 0
    %1842 = vmatprep.mubr.bf16.mxu0 0
    %1843 = vmatmul.mubr.bf16.gmra.mrb[0].mxu0 %v1686
    %v1844 = vpop.f32.mrb[0].mxu0
    %v1845 = vadd.f32 %v1723, %v1844
    %v1846 = vpop.f32.mrb[0].mxu0
    %v1847 = vadd.f32 %v1727, %v1846
    %v1848 = vpop.f32.mrb[0].mxu0
    %v1849 = vadd.f32 %v1723, %v1848
    %v1850 = vpop.f32.mrb[0].mxu0
    %v1851 = vadd.f32 %v1727, %v1850
    %1852 = vmatprep.mubr.bf16.mxu0 0
    %1853 = vmatmul.mubr.bf16.gmra.mrb[0].mxu0 %v1687
    %v1854 = vpop.f32.mrb[0].mxu0
    %v1855 = vadd.f32 %v1723, %v1854
    %v1856 = vpop.f32.mrb[0].mxu0
    %v1857 = vadd.f32 %v1727, %v1856
    %v1858 = vpop.f32.mrb[0].mxu0
    %v1859 = vadd.f32 %v1723, %v1858
    %v1860 = vpop.f32.mrb[0].mxu0
    %v1861 = vadd.f32 %v1727, %v1860
    %1862 = vmatprep.mubr.bf16.mxu0 0
    %1863 = vmatmul.mubr.bf16.gmra.mrb[0].mxu0 %v1688
    %v1864 = vpop.f32.mrb[0].mxu0
    %v1865 = vadd.f32 %v1723, %v1864
    %v1866 = vpop.f32.mrb[0].mxu0
    %v1867 = vadd.f32 %v1727, %v1866
    %v1868 = vpop.f32.mrb[0].mxu0
    %v1869 = vadd.f32 %v1723, %v1868
    %v1870 = vpop.f32.mrb[0].mxu0
    %v1871 = vadd.f32 %v1727, %v1870
    %1872 = vmatprep.mubr.bf16.mxu0 0
    %1873 = vmatmul.mubr.bf16.gmra.mrb[0].mxu0 %v1689
    %v1874 = vpop.f32.mrb[0].mxu0
    %v1875 = vadd.f32 %v1723, %v1874
    %v1876 = vpop.f32.mrb[0].mxu0
    %v1877 = vadd.f32 %v1727, %v1876
    %v1878 = vpop.f32.mrb[0].mxu0
    %v1879 = vadd.f32 %v1723, %v1878
    %v1880 = vpop.f32.mrb[0].mxu0
    %v1881 = vadd.f32 %v1727, %v1880
    %1882 = vmatprep.mubr.bf16.mxu0 0
    %1883 = vmatmul.mubr.bf16.gmra.mrb[0].mxu0 %v1690
    %v1884 = vpop.f32.mrb[0].mxu0
    %v1885 = vadd.f32 %v1723, %v1884
    %v1886 = vpop.f32.mrb[0].mxu0
    %v1887 = vadd.f32 %v1727, %v1886
    %v1888 = vpop.f32.mrb[0].mxu0
    %v1889 = vadd.f32 %v1723, %v1888
    %v1890 = vpop.f32.mrb[0].mxu0
    %v1891 = vadd.f32 %v1727, %v1890
    %1892 = vmatprep.mubr.bf16.mxu0 0
    %1893 = vmatmul.mubr.bf16.gmra.mrb[0].mxu0 %v1691
    %v1894 = vpop.f32.mrb[0].mxu0
    %v1895 = vadd.f32 %v1723, %v1894
    %v1896 = vpop.f32.mrb[0].mxu0
    %v1897 = vadd.f32 %v1727, %v1896
    %v1898 = vpop.f32.mrb[0].mxu0
    %v1899 = vadd.f32 %v1723, %v1898
    %v1900 = vpop.f32.mrb[0].mxu0
    %v1901 = vadd.f32 %v1727, %v1900
    %1902 = vmatprep.mubr.bf16.mxu0 0
    %1903 = vmatmul.mubr.bf16.gmra.mrb[0].mxu0 %v1692
    %v1904 = vpop.f32.mrb[0].mxu0
    %v1905 = vadd.f32 %v1723, %v1904
    %v1906 = vpop.f32.mrb[0].mxu0
    %v1907 = vadd.f32 %v1727, %v1906
    %v1908 = vpop.f32.mrb[0].mxu0
    %v1909 = vadd.f32 %v1723, %v1908
    %v1910 = vpop.f32.mrb[0].mxu0
    %v1911 = vadd.f32 %v1727, %v1910
    %1912 = vmatprep.mubr.bf16.mxu0 0
    %1913 = vmatmul.mubr.bf16.gmra.mrb[0].mxu0 %v1693
    %v1914 = vpop.f32.mrb[0].mxu0
    %v1915 = vadd.f32 %v1723, %v1914
    %v1916 = vpop.f32.mrb[0].mxu0
    %v1917 = vadd.f32 %v1727, %v1916
    %v1918 = vpop.f32.mrb[0].mxu0
    %v1919 = vadd.f32 %v1723, %v1918
    %v1920 = vpop.f32.mrb[0].mxu0
    %v1921 = vadd.f32 %v1727, %v1920
    %1922 = vmatprep.mubr.bf16.mxu0 0
    %1923 = vmatmul.mubr.bf16.gmra.mrb[0].mxu0 %v1694
    %v1924 = vpop.f32.mrb[0].mxu0
    %v1925 = vadd.f32 %v1723, %v1924
    %v1926 = vpop.f32.mrb[0].mxu0
    %v1927 = vadd.f32 %v1727, %v1926
    %v1928 = vpop.f32.mrb[0].mxu0
    %v1929 = vadd.f32 %v1723, %v1928
    %v1930 = vpop.f32.mrb[0].mxu0
    %v1931 = vadd.f32 %v1727, %v1930
    %1932 = vmatprep.mubr.bf16.mxu0 0
    %1933 = vmatmul.mubr.bf16.gmra.mrb[0].mxu0 %v1695
    %v1934 = vpop.f32.mrb[0].mxu0
    %v1935 = vadd.f32 %v1723, %v1934
    %v1936 = vpop.f32.mrb[0].mxu0
    %v1937 = vadd.f32 %v1727, %v1936
    %v1938 = vpop.f32.mrb[0].mxu0
    %v1939 = vadd.f32 %v1723, %v1938
    %v1940 = vpop.f32.mrb[0].mxu0
    %v1941 = vadd.f32 %v1727, %v1940
    %1942 = vmatprep.mubr.bf16.mxu0 0
    %1943 = vmatmul.mubr.bf16.gmra.mrb[0].mxu0 %v1696
    %v1944 = vpop.f32.mrb[0].mxu0
    %v1945 = vadd.f32 %v1723, %v1944
    %v1946 = vpop.f32.mrb[0].mxu0
    %v1947 = vadd.f32 %v1727, %v1946
    %v1948 = vpop.f32.mrb[0].mxu0
    %v1949 = vadd.f32 %v1723, %v1948
    %v1950 = vpop.f32.mrb[0].mxu0
    %v1951 = vadd.f32 %v1727, %v1950
    %1952 = vmatprep.mubr.bf16.mxu0 0
    %1953 = vmatmul.mubr.bf16.gmra.mrb[0].mxu0 %v1697
    %v1954 = vpop.f32.mrb[0].mxu0
    %v1955 = vadd.f32 %v1723, %v1954
    %v1956 = vpop.f32.mrb[0].mxu0
    %v1957 = vadd.f32 %v1727, %v1956
    %v1958 = vpop.f32.mrb[0].mxu0
    %v1959 = vadd.f32 %v1723, %v1958
    %v1960 = vpop.f32.mrb[0].mxu0
    %v1961 = vadd.f32 %v1727, %v1960
    %1962 = vmatprep.mubr.bf16.mxu0 0
    %1963 = vmatmul.mubr.bf16.gmra.mrb[0].mxu0 %v1698
    %v1964 = vpop.f32.mrb[0].mxu0
    %v1965 = vadd.f32 %v1723, %v1964
    %v1966 = vpop.f32.mrb[0].mxu0
    %v1967 = vadd.f32 %v1727, %v1966
    %v1968 = vpop.f32.mrb[0].mxu0
    %v1969 = vadd.f32 %v1723, %v1968
    %v1970 = vpop.f32.mrb[0].mxu0
    %v1971 = vadd.f32 %v1727, %v1970
    %1972 = vmatprep.mubr.bf16.mxu0 0
    %1973 = vmatmul.mubr.bf16.gmra.mrb[0].mxu0 %v1699
    %v1974 = vpop.f32.mrb[0].mxu0
    %v1975 = vadd.f32 %v1723, %v1974
    %v1976 = vpop.f32.mrb[0].mxu0
    %v1977 = vadd.f32 %v1727, %v1976
    %v1978 = vpop.f32.mrb[0].mxu0
    %v1979 = vadd.f32 %v1723, %v1978
    %v1980 = vpop.f32.mrb[0].mxu0
    %v1981 = vadd.f32 %v1727, %v1980
    %1982 = vmatprep.mubr.bf16.mxu0 0
    %1983 = vmatmul.mubr.bf16.gmra.mrb[0].mxu0 %v1700
    %v1984 = vpop.f32.mrb[0].mxu0
    %v1985 = vadd.f32 %v1723, %v1984
    %v1986 = vpop.f32.mrb[0].mxu0
    %v1987 = vadd.f32 %v1727, %v1986
    %v1988 = vpop.f32.mrb[0].mxu0
    %v1989 = vadd.f32 %v1723, %v1988
    %v1990 = vpop.f32.mrb[0].mxu0
    %v1991 = vadd.f32 %v1727, %v1990
    %1992 = vmatprep.mubr.bf16.mxu0 0
    %1993 = vmatmul.mubr.bf16.gmra.mrb[0].mxu0 %v1701
    %v1994 = vpop.f32.mrb[0].mxu0
    %v1995 = vadd.f32 %v1723, %v1994
    %v1996 = vpop.f32.mrb[0].mxu0
    %v1997 = vadd.f32 %v1727, %v1996
    %v1998 = vpop.f32.mrb[0].mxu0
    %v1999 = vadd.f32 %v1723, %v1998
    %v2000 = vpop.f32.mrb[0].mxu0
    %v2001 = vadd.f32 %v1727, %v2000
    %2002 = vdwg.mxu0
    %v2003 = vmax.f32 %v1845, 0.0
    %v2004 = vmax.f32 %v1847, 0.0
    %v2005 = vmax.f32 %v1849, 0.0
    %v2006 = vmax.f32 %v1851, 0.0
    %v2007 = vmax.f32 %v1855, 0.0
    %v2008 = vmax.f32 %v1857, 0.0
    %v2009 = vmax.f32 %v1859, 0.0
    %v2010 = vmax.f32 %v1861, 0.0
    %v2011 = vmax.f32 %v1865, 0.0
    %v2012 = vmax.f32 %v1867, 0.0
    %v2013 = vmax.f32 %v1869, 0.0
    %v2014 = vmax.f32 %v1871, 0.0
    %v2015 = vmax.f32 %v1875, 0.0
    %v2016 = vmax.f32 %v1877, 0.0
    %v2017 = vmax.f32 %v1879, 0.0
    %v2018 = vmax.f32 %v1881, 0.0
    %v2019 = vmax.f32 %v1885, 0.0
    %v2020 = vmax.f32 %v1887, 0.0
    %v2021 = vmax.f32 %v1889, 0.0
    %v2022 = vmax.f32 %v1891, 0.0
    %v2023 = vmax.f32 %v1895, 0.0
    %v2024 = vmax.f32 %v1897, 0.0
    %v2025 = vmax.f32 %v1899, 0.0
    %v2026 = vmax.f32 %v1901, 0.0
    %v2027 = vmax.f32 %v1905, 0.0
    %v2028 = vmax.f32 %v1907, 0.0
    %v2029 = vmax.f32 %v1909, 0.0
    %v2030 = vmax.f32 %v1911, 0.0
    %v2031 = vmax.f32 %v1915, 0.0
    %v2032 = vmax.f32 %v1917, 0.0
    %v2033 = vmax.f32 %v1919, 0.0
    %v2034 = vmax.f32 %v1921, 0.0
    %v2035 = vmax.f32 %v1925, 0.0
    %v2036 = vmax.f32 %v1927, 0.0
    %v2037 = vmax.f32 %v1929, 0.0
    %v2038 = vmax.f32 %v1931, 0.0
    %v2039 = vmax.f32 %v1935, 0.0
    %v2040 = vmax.f32 %v1937, 0.0
    %v2041 = vmax.f32 %v1939, 0.0
    %v2042 = vmax.f32 %v1941, 0.0
    %v2043 = vmax.f32 %v1945, 0.0
    %v2044 = vmax.f32 %v1947, 0.0
    %v2045 = vmax.f32 %v1949, 0.0
    %v2046 = vmax.f32 %v1951, 0.0
    %v2047 = vmax.f32 %v1955, 0.0
    %v2048 = vmax.f32 %v1957, 0.0
    %v2049 = vmax.f32 %v1959, 0.0
    %v2050 = vmax.f32 %v1961, 0.0
    %v2051 = vmax.f32 %v1965, 0.0
    %v2052 = vmax.f32 %v1967, 0.0
    %v2053 = vmax.f32 %v1969, 0.0
    %v2054 = vmax.f32 %v1971, 0.0
    %v2055 = vmax.f32 %v1975, 0.0
    %v2056 = vmax.f32 %v1977, 0.0
    %v2057 = vmax.f32 %v1979, 0.0
    %v2058 = vmax.f32 %v1981, 0.0
    %v2059 = vmax.f32 %v1985, 0.0
    %v2060 = vmax.f32 %v1987, 0.0
    %v2061 = vmax.f32 %v1989, 0.0
    %v2062 = vmax.f32 %v1991, 0.0
    %v2063 = vmax.f32 %v1995, 0.0
    %v2064 = vmax.f32 %v1997, 0.0
    %v2065 = vmax.f32 %v1999, 0.0
    %v2066 = vmax.f32 %v2001, 0.0
    %2067 = vst [vmem:[#allocation2] sm:$0xff] %v2003
    %2068 = vst [vmem:[#allocation2 + $0x8] sm:$0xff] %v2004
    %2069 = vst [vmem:[#allocation2 + $0x10] sm:$0xff] %v2005
    %2070 = vst [vmem:[#allocation2 + $0x18] sm:$0xff] %v2006
    %2071 = vst [vmem:[#allocation2 + $0x20] sm:$0xff] %v2007
    %2072 = vst [vmem:[#allocation2 + $0x28] sm:$0xff] %v2008
    %2073 = vst [vmem:[#allocation2 + $0x30] sm:$0xff] %v2009
    %2074 = vst [vmem:[#allocation2 + $0x38] sm:$0xff] %v2010
    %2075 = vst [vmem:[#allocation2 + $0x40] sm:$0xff] %v2011
    %2076 = vst [vmem:[#allocation2 + $0x48] sm:$0xff] %v2012
    %2077 = vst [vmem:[#allocation2 + $0x50] sm:$0xff] %v2013
    %2078 = vst [vmem:[#allocation2 + $0x58] sm:$0xff] %v2014
    %2079 = vst [vmem:[#allocation2 + $0x60] sm:$0xff] %v2015
    %2080 = vst [vmem:[#allocation2 + $0x68] sm:$0xff] %v2016
    %2081 = vst [vmem:[#allocation2 + $0x70] sm:$0xff] %v2017
    %2082 = vst [vmem:[#allocation2 + $0x78] sm:$0xff] %v2018
    %2083 = vst [vmem:[#allocation2 + $0x80] sm:$0xff] %v2019
    %2084 = vst [vmem:[#allocation2 + $0x88] sm:$0xff] %v2020
    %2085 = vst [vmem:[#allocation2 + $0x90] sm:$0xff] %v2021
    %2086 = vst [vmem:[#allocation2 + $0x98] sm:$0xff] %v2022
    %2087 = vst [vmem:[#allocation2 + $0xa0] sm:$0xff] %v2023
    %2088 = vst [vmem:[#allocation2 + $0xa8] sm:$0xff] %v2024
    %2089 = vst [vmem:[#allocation2 + $0xb0] sm:$0xff] %v2025
    %2090 = vst [vmem:[#allocation2 + $0xb8] sm:$0xff] %v2026
    %2091 = vst [vmem:[#allocation2 + $0xc0] sm:$0xff] %v2027
    %2092 = vst [vmem:[#allocation2 + $0xc8] sm:$0xff] %v2028
    %2093 = vst [vmem:[#allocation2 + $0xd0] sm:$0xff] %v2029
    %2094 = vst [vmem:[#allocation2 + $0xd8] sm:$0xff] %v2030
    %2095 = vst [vmem:[#allocation2 + $0xe0] sm:$0xff] %v2031
    %2096 = vst [vmem:[#allocation2 + $0xe8] sm:$0xff] %v2032
    %2097 = vst [vmem:[#allocation2 + $0xf0] sm:$0xff] %v2033
    %2098 = vst [vmem:[#allocation2 + $0xf8] sm:$0xff] %v2034
    %2099 = vst [vmem:[#allocation2 + $0x100] sm:$0xff] %v2035
    %2100 = vst [vmem:[#allocation2 + $0x108] sm:$0xff] %v2036
    %2101 = vst [vmem:[#allocation2 + $0x110] sm:$0xff] %v2037
    %2102 = vst [vmem:[#allocation2 + $0x118] sm:$0xff] %v2038
    %2103 = vst [vmem:[#allocation2 + $0x120] sm:$0xff] %v2039
    %2104 = vst [vmem:[#allocation2 + $0x128] sm:$0xff] %v2040
    %2105 = vst [vmem:[#allocation2 + $0x130] sm:$0xff] %v2041
    %2106 = vst [vmem:[#allocation2 + $0x138] sm:$0xff] %v2042
    %2107 = vst [vmem:[#allocation2 + $0x140] sm:$0xff] %v2043
    %2108 = vst [vmem:[#allocation2 + $0x148] sm:$0xff] %v2044
    %2109 = vst [vmem:[#allocation2 + $0x150] sm:$0xff] %v2045
    %2110 = vst [vmem:[#allocation2 + $0x158] sm:$0xff] %v2046
    %2111 = vst [vmem:[#allocation2 + $0x160] sm:$0xff] %v2047
    %2112 = vst [vmem:[#allocation2 + $0x168] sm:$0xff] %v2048
    %2113 = vst [vmem:[#allocation2 + $0x170] sm:$0xff] %v2049
    %2114 = vst [vmem:[#allocation2 + $0x178] sm:$0xff] %v2050
    %2115 = vst [vmem:[#allocation2 + $0x180] sm:$0xff] %v2051
    %2116 = vst [vmem:[#allocation2 + $0x188] sm:$0xff] %v2052
    %2117 = vst [vmem:[#allocation2 + $0x190] sm:$0xff] %v2053
    %2118 = vst [vmem:[#allocation2 + $0x198] sm:$0xff] %v2054
    %2119 = vst [vmem:[#allocation2 + $0x1a0] sm:$0xff] %v2055
    %2120 = vst [vmem:[#allocation2 + $0x1a8] sm:$0xff] %v2056
    %2121 = vst [vmem:[#allocation2 + $0x1b0] sm:$0xff] %v2057
    %2122 = vst [vmem:[#allocation2 + $0x1b8] sm:$0xff] %v2058
    %2123 = vst [vmem:[#allocation2 + $0x1c0] sm:$0xff] %v2059
    %2124 = vst [vmem:[#allocation2 + $0x1c8] sm:$0xff] %v2060
    %2125 = vst [vmem:[#allocation2 + $0x1d0] sm:$0xff] %v2061
    %2126 = vst [vmem:[#allocation2 + $0x1d8] sm:$0xff] %v2062
    %2127 = vst [vmem:[#allocation2 + $0x1e0] sm:$0xff] %v2063
    %2128 = vst [vmem:[#allocation2 + $0x1e8] sm:$0xff] %v2064
    %2129 = vst [vmem:[#allocation2 + $0x1f0] sm:$0xff] %v2065
    %2130 = vst [vmem:[#allocation2 + $0x1f8] sm:$0xff] %v2066
    // Predicated region
    $region54: #{forward.1} parent=1 // pred_check
      _
    $region55: #{forward.1} parent=1 // pred_check_branch
      %2132 = sbr.rel (0) target = $region57
    $region56: #{forward.1} parent=1 // pred_region
      %s2134 = ssub.s32 8192, 8192
      %2135 = vsyncadd [#allocation3], %s2134
      %s2136 = sshll.u32 [#allocation2], 4
      %s2137 = int_to_ptr.vmem [resolvable:$true] %s2136
      %2142 = dma.vmem_to_hbm [thread:$0]  %s2137, 8192, %s13, [#allocation3], 256, 256, 16
    $region57: #{forward.1} parent=1 // pred_fallthru
      _
    // Predicated region
    $region58: #{forward.1} parent=1 // pred_check
      _
    $region59: #{forward.1} parent=1 // pred_check_branch
      %2144 = sbr.rel (0) target = $region61
    $region60: #{forward.1} parent=1 // pred_region
      %2145 = dma.done [#allocation3], 8192
    $region61: #{forward.1} parent=1 // pred_fallthru
      _
    %2146 = vsyncpa [#allocation3], 1

</llo_original>
